<compile_context>
chip_gen: v7x
topology: tpu7x:2x2x1
jax: 0.10.0
libtpu: 0.0.40
codegen_flags: <defaults>
</compile_context>

<pallas_src>
import numpy as np
import jax
import jax.numpy as jnp
from jax import lax
from jax.experimental import pallas as pl
from jax.experimental.pallas import tpu as pltpu

IN_NODE_NF = 11
IN_EDGE_NF = 4
H_NF = 4
OUT_NF = 4
EMB_NF = 2
COORD_DIM = 3

NODE_TBL_F = IN_NODE_NF + COORD_DIM            # 14: [node_feats | coords]
GATH_F = H_NF + COORD_DIM                      # 7 : gathered [We1 projection | coords]
ACC_F = COORD_DIM + IN_EDGE_NF                 # 7 : fused scatter [trans | edge_out]
F_EDGE_OUT = EMB_NF + IN_EDGE_NF               # 6 : [edge_emb | recon_edge]
F_NODE_OUT = EMB_NF + IN_NODE_NF + COORD_DIM   # 16: [node_emb | recon_node | coord_out]

# dtype used for the big one-hot gather/scatter MXU operands (f32 accumulate).
# Set to jnp.float32 for bit-closer-to-reference numerics.
MXU_DTYPE = jnp.bfloat16


def _round_up(x, m):
    return ((x + m - 1) // m) * m


# ---------------------------------------------------------------------------
# Packed weight slab layout (all tiny parameters in one VMEM-resident array).
# Edge-path weights are stored pre-transposed because the edge kernel computes in
# (feature, edge) layout; node-path weights stay row-major for the finalize kernel.
# ---------------------------------------------------------------------------
_PARAM_SPECS = [
    # (slab_name, rows, cols, source param, transpose?)
    ("we1_i_t",  H_NF, IN_NODE_NF, "we1_i",  True),
    ("we1_j_t",  H_NF, IN_NODE_NF, "we1_j",  True),
    ("we1_e_t",  H_NF, IN_EDGE_NF, "we1_e",  True),
    ("we1_r_t",  H_NF, 1,          "we1_r",  True),
    ("be1_t",    H_NF, 1,          "be1",    True),
    ("we2_t",    IN_EDGE_NF, H_NF, "we2",    True),
    ("be2_t",    IN_EDGE_NF, 1,    "be2",    True),
    ("wc1_t",    2, IN_EDGE_NF,    "wc1",    True),
    ("bc1_t",    2, 1,             "bc1",    True),
    ("wc2_t",    2, 1,             "wc2",    True),
    ("w_eo2e_t", EMB_NF, IN_EDGE_NF, "w_eo2e", True),
    ("b_eo2e_t", EMB_NF, 1,        "b_eo2e", True),
    ("w_ee2f_t", IN_EDGE_NF, EMB_NF, "w_ee2f", True),
    ("b_ee2f_t", IN_EDGE_NF, 1,    "b_ee2f", True),
    # node-side (row-major, used in the finalize kernel)
    ("wcm",   COORD_DIM, COORD_DIM, "wcm",   False),
    ("bcm",   1, COORD_DIM,         "bcm",   False),
    ("wn1_x", IN_NODE_NF, H_NF,     "wn1_x", False),
    ("wn1_a", IN_EDGE_NF, H_NF,     "wn1_a", False),
    ("wn1_c", COORD_DIM, H_NF,      "wn1_c", False),
    ("bn1",   1, H_NF,              "bn1",   False),
    ("wn2",   H_NF, OUT_NF,         "wn2",   False),
    ("bn2",   1, OUT_NF,            "bn2",   False),
    ("w_no2e", OUT_NF, EMB_NF,      "w_no2e", False),
    ("b_no2e", 1, EMB_NF,           "b_no2e", False),
    ("w_ne2f", EMB_NF, IN_NODE_NF,  "w_ne2f", False),
    ("b_ne2f", 1, IN_NODE_NF,       "b_ne2f", False),
]
_PARAM_SHAPE_MAP = {name: (r, c) for name, r, c, _, _ in _PARAM_SPECS}
_PARAM_OFFSETS = {}
_off = 0
for _name, _r, _c, _, _ in _PARAM_SPECS:
    _PARAM_OFFSETS[_name] = _off
    _off += _round_up(_r, 8)          # 8-row alignment -> clean static sub-tile slices
_SLAB_ROWS = _round_up(_off, 8)
_SLAB_COLS = 16


def pack_weight_slab(params):
    slab = jnp.zeros((_SLAB_ROWS, _SLAB_COLS), jnp.float32)
    for name, r, c, src, tr in _PARAM_SPECS:
        w = params[src].astype(jnp.float32)
        if tr:
            w = w.T
        o = _PARAM_OFFSETS[name]
        slab = slab.at[o:o + r, 0:c].set(w)
    return slab


# ---------------------------------------------------------------------------
# Kernel 1: edge-tiled message passing in (feature, edge) layout.
#   grid = (num_cores [parallel], edge_tiles_per_core [arbitrary])
#   outputs: lane-dense per-edge slab (6, E_pad) and per-core partial scatter acc (NC, N, 7).
# ---------------------------------------------------------------------------
def _edge_kernel(edge_i_ref, edge_j_ref, edge_attr_ref, node_tbl_t_ref, w_ref,
                 edge_slab_ref, part_acc_ref,
                 tbl_i_ref, tbl_j_ref):
    f32 = jnp.float32
    e_idx = pl.program_id(1)

    def w(name):
        r, c = _PARAM_SHAPE_MAP[name]
        o = _PARAM_OFFSETS[name]
        return w_ref[o:o + r, 0:c]

    def mm(a, b):
        return jnp.dot(a, b, preferred_element_type=f32)

    N = node_tbl_t_ref.shape[1]
    TE = edge_attr_ref.shape[1]

    # Per-core init: cache the projected bf16 gather tables + zero the partial accumulator.
    @pl.when(e_idx == 0)
    def _init():
        nf_t = node_tbl_t_ref[:IN_NODE_NF, :]           # (11, N) f32
        coords_t = node_tbl_t_ref[IN_NODE_NF:, :]       # (3, N)  f32
        tbl_i_ref[...] = jnp.concatenate(
            [mm(w("we1_i_t"), nf_t), coords_t], axis=0).astype(MXU_DTYPE)   # (7, N)
        tbl_j_ref[...] = jnp.concatenate(
            [mm(w("we1_j_t"), nf_t), coords_t], axis=0).astype(MXU_DTYPE)   # (7, N)
        part_acc_ref[...] = jnp.zeros_like(part_acc_ref)

    # Transposed one-hots (N, TE): bool-compare cast, exact in bf16.
    row_n = lax.broadcasted_iota(jnp.int32, (N, TE), 0)
    oh_i = (edge_i_ref[...] == row_n).astype(MXU_DTYPE)
    oh_j = (edge_j_ref[...] == row_n).astype(MXU_DTYPE)

    # Fused gathers: one MXU pass per endpoint pulls [We1 projection | coords], lane-dense.
    gath_i = mm(tbl_i_ref[...], oh_i)                   # (7, TE) f32
    gath_j = mm(tbl_j_ref[...], oh_j)
    h_i, coords_i = gath_i[:H_NF, :], gath_i[H_NF:, :]
    h_j, coords_j = gath_j[:H_NF, :], gath_j[H_NF:, :]

    # ---- coord_to_radial ----
    cd = coords_i - coords_j                            # (3, TE)
    radial = jnp.sum(cd * cd, axis=0, keepdims=True)    # (1, TE)
    inv_norm = pl.reciprocal(jnp.sqrt(radial) + 1.0, approx=True)
    normed_cd = cd * inv_norm

    # ---- edge_model (first-layer node projections already folded into the gather) ----
    h_e = (h_i + h_j + mm(w("we1_e_t"), edge_attr_ref[...])
           + w("we1_r_t") * radial + w("be1_t"))        # (4, TE)
    h_e = jnp.maximum(h_e, 0.0)
    edge_out = mm(w("we2_t"), h_e) + w("be2_t")         # (4, TE)

    # ---- coord_edge_mlp -> trans ----
    h_c = jnp.maximum(mm(w("wc1_t"), edge_out) + w("bc1_t"), 0.0)    # (2, TE)
    e_c = jnp.sum(h_c * w("wc2_t"), axis=0, keepdims=True)           # (1, TE), no-bias layer
    trans = normed_cd * e_c                                          # (3, TE)

    # ---- fused scatter_add of [trans | edge_out] onto this core's partial accumulator ----
    scat = jnp.concatenate([trans, edge_out], axis=0).astype(MXU_DTYPE)   # (7, TE)
    part_acc_ref[...] += lax.dot_general(
        oh_i, scat, (((1,), (1,)), ((), ())), preferred_element_type=f32)[None]   # (1, N, 7)

    # ---- per-edge outputs, lane-dense: [edge_emb(2) | recon_edge(4)] x TE ----
    edge_emb = mm(w("w_eo2e_t"), edge_out) + w("b_eo2e_t")           # (2, TE)
    recon_edge = mm(w("w_ee2f_t"), edge_emb) + w("b_ee2f_t")         # (4, TE)
    edge_slab_ref[...] = jnp.concatenate([edge_emb, recon_edge], axis=0)


# ---------------------------------------------------------------------------
# Kernel 2: combine per-core partials, node-side finalize + global mean pool.
# ---------------------------------------------------------------------------
def _node_kernel(node_tbl_ref, batch_ref, w_ref, part_acc_ref,
                 node_slab_ref, graph_emb_ref):
    f32 = jnp.float32

    def w(name):
        r, c = _PARAM_SHAPE_MAP[name]
        o = _PARAM_OFFSETS[name]
        return w_ref[o:o + r, 0:c]

    def mm(a, b):
        return jnp.dot(a, b, preferred_element_type=f32)

    node_tbl = node_tbl_ref[...]                        # (N, 14) f32
    node_feats = node_tbl[:, :IN_NODE_NF]
    coords = node_tbl[:, IN_NODE_NF:]
    acc = jnp.sum(part_acc_ref[...], axis=0)            # (N, 7) combine per-core partials
    agg_trans = acc[:, :COORD_DIM]
    agg_edge = acc[:, COORD_DIM:]

    coords_new = coords + agg_trans
    coord_out = mm(coords_new, w("wcm")) + w("bcm")     # (N, 3)

    h_n = (mm(node_feats, w("wn1_x")) + mm(agg_edge, w("wn1_a"))
           + mm(coord_out, w("wn1_c")) + w("bn1"))
    h_n = jnp.maximum(h_n, 0.0)
    node_out = mm(h_n, w("wn2")) + w("bn2")             # (N, 4)

    node_emb = mm(node_out, w("w_no2e")) + w("b_no2e")  # (N, 2)
    recon_node = mm(node_emb, w("w_ne2f")) + w("b_ne2f")  # (N, 11)

    # lane-packed per-node output slab: [node_emb | recon_node | coord_out] = (N, 16)
    node_slab_ref[...] = jnp.concatenate([node_emb, recon_node, coord_out], axis=1)

    # ---- global mean pool ----
    B = graph_emb_ref.shape[0]
    N = node_tbl.shape[0]
    col_b = lax.broadcasted_iota(jnp.int32, (N, B), 1)
    oh_b = (batch_ref[...] == col_b).astype(f32)        # (N, B)
    sums = lax.dot_general(oh_b, node_emb, (((0,), (0,)), ((), ())),
                           preferred_element_type=f32)  # (B, 2)
    counts = lax.dot_general(oh_b, jnp.ones((N, 1), f32), (((0,), (0,)), ((), ())),
                             preferred_element_type=f32)  # (B, 1)
    graph_emb_ref[...] = sums * pl.reciprocal(jnp.maximum(counts, 1.0), approx=True)


# ---------------------------------------------------------------------------
# Kernel 3: (i, j)-tiled adjacency decoder (parallel x parallel grid).
# ---------------------------------------------------------------------------
def _adj_kernel(emb_i_ref, emb_j_ref, w_adj_ref, b_adj_ref, adj_ref):
    f32 = jnp.float32
    xi = emb_i_ref[...].astype(f32)                     # (TI, EMB)
    xj = emb_j_ref[...].astype(f32)                     # (TJ, EMB)
    ti, tj = xi.shape[0], xj.shape[0]

    # ||xi - xj||^2 = [|xi|^2, 1, -2 xi] . [1, |xj|^2, xj]  -> single MXU pass.
    rsq_i = jnp.sum(xi * xi, axis=1, keepdims=True)
    rsq_j = jnp.sum(xj * xj, axis=1, keepdims=True)
    a = jnp.concatenate([rsq_i, jnp.ones((ti, 1), f32), -2.0 * xi], axis=1)   # (TI, EMB+2)
    b = jnp.concatenate([jnp.ones((tj, 1), f32), rsq_j, xj], axis=1)          # (TJ, EMB+2)
    dist2 = lax.dot_general(a, b, (((1,), (1,)), ((), ())),
                            preferred_element_type=f32)                       # (TI, TJ)

    adj = jax.nn.sigmoid(dist2 * w_adj_ref[0, 0] + b_adj_ref[0, 0])
    adj_ref[...] = adj

    # Remove self loops only on tiles whose global row range intersects the column range.
    row0 = pl.program_id(0) * ti
    col0 = pl.program_id(1) * tj

    @pl.when(jnp.logical_and(row0 < col0 + tj, col0 < row0 + ti))
    def _mask_diag():
        row_g = row0 + lax.broadcasted_iota(jnp.int32, (ti, tj), 0)
        col_g = col0 + lax.broadcasted_iota(jnp.int32, (ti, tj), 1)
        adj_ref[...] = jnp.where(row_g == col_g, 0.0, adj)


# ---------------------------------------------------------------------------
# Parameters.
# ---------------------------------------------------------------------------
def init_params(key):
    """Deterministic synthetic parameters matching the PyTorch module's shapes."""
    def linear(k, fan_in, fan_out):
        wk, bk = jax.random.split(k)
        bound = 1.0 / (fan_in ** 0.5)
        w = jax.random.uniform(wk, (fan_in, fan_out), jnp.float32, -bound, bound)
        b = jax.random.uniform(bk, (1, fan_out), jnp.float32, -bound, bound)
        return w, b

    keys = jax.random.split(key, 12)
    p = {}
    # edge_mlp layer 1: input = [fs_i(11) | fs_j(11) | edge_attr(4) | radial(1)] = 27
    we1, be1 = linear(keys[0], IN_NODE_NF * 2 + IN_EDGE_NF + 1, H_NF)
    p["we1_i"], p["we1_j"] = we1[:IN_NODE_NF], we1[IN_NODE_NF:2 * IN_NODE_NF]
    p["we1_e"] = we1[2 * IN_NODE_NF:2 * IN_NODE_NF + IN_EDGE_NF]
    p["we1_r"] = we1[-1:]
    p["be1"] = be1
    p["we2"], p["be2"] = linear(keys[1], H_NF, IN_EDGE_NF)
    # coord_edge_mlp: Linear(4->2) + ReLU + Linear(2->1, no bias, xavier gain 0.001)
    p["wc1"], p["bc1"] = linear(keys[2], IN_EDGE_NF, 2)
    p["wc2"] = 0.001 * jax.random.uniform(keys[3], (1, 2), jnp.float32, -1.0, 1.0)
    # coord_mlp
    p["wcm"], p["bcm"] = linear(keys[4], COORD_DIM, COORD_DIM)
    # node_mlp layer 1: input = [node_feats(11) | agg(4) | coord(3)] = 18
    wn1, bn1 = linear(keys[5], IN_NODE_NF + IN_EDGE_NF + COORD_DIM, H_NF)
    p["wn1_x"] = wn1[:IN_NODE_NF]
    p["wn1_a"] = wn1[IN_NODE_NF:IN_NODE_NF + IN_EDGE_NF]
    p["wn1_c"] = wn1[-COORD_DIM:]
    p["bn1"] = bn1
    p["wn2"], p["bn2"] = linear(keys[6], H_NF, OUT_NF)
    # AE heads
    p["w_no2e"], p["b_no2e"] = linear(keys[7], OUT_NF, EMB_NF)
    p["w_eo2e"], p["b_eo2e"] = linear(keys[8], IN_EDGE_NF, EMB_NF)
    p["w_ne2f"], p["b_ne2f"] = linear(keys[9], EMB_NF, IN_NODE_NF)
    p["w_ee2f"], p["b_ee2f"] = linear(keys[10], EMB_NF, IN_EDGE_NF)
    p["w_adj"] = jnp.full((1, 1), 0.5, jnp.float32)
    p["b_adj"] = jnp.full((1, 1), 0.8, jnp.float32)
    return p


# ---------------------------------------------------------------------------
# Wrapper.
# ---------------------------------------------------------------------------
def _pick_div(n, candidates):
    for c in candidates:
        if n % c == 0:
            return c
    return n


def nec_ae_forward(params, node_feats, edge_index, edge_attr, coords,
                   node_batch_vec, num_graphs, *,
                   edge_tile=None, num_cores=2, adj_tile_i=None, adj_tile_j=None):
    f32 = jnp.float32
    N = node_feats.shape[0]
    E = edge_attr.shape[0]
    B = int(num_graphs)
    NC = max(1, int(num_cores))

    # fused node tables (+ transposed copy for the lane-dense edge kernel) + packed weights
    node_tbl = jnp.concatenate([node_feats.astype(f32), coords.astype(f32)], axis=1)  # (N, 14)
    node_tbl_t = node_tbl.T                                                           # (14, N)
    batch = node_batch_vec.astype(jnp.int32).reshape(N, 1)
    wslab = pack_weight_slab(params)

    # ---- VMEM budget & edge tile, derived from the chip's VMEM capacity ----
    try:
        vmem_cap = int(getattr(pltpu.get_tpu_info(), "vmem_capacity_bytes", 128 << 20))
    except Exception:  # pragma: no cover - conservative fallback off-TPU
        vmem_cap = 128 << 20
    vmem_limit = int(min(vmem_cap * 3 // 4, 100 << 20))
    if edge_tile is None:
        # per-tile one-hot footprint ~ (4B iota + 2x2B bf16) * TE * N; keep within ~1/3 of budget
        te = (vmem_limit // 3) // max(1, 8 * N)
        TE = int(min(1024, max(128, (te // 128) * 128)))
    else:
        TE = max(128, _round_up(int(edge_tile), 128))   # 128-multiple keeps edge stores lane-dense

    E_pad = _round_up(max(E, 1), TE * NC)
    n_per_core = E_pad // (TE * NC)
    pad = E_pad - E

    # transposed (lane-dense) edge inputs; sentinel index -1 -> all-zero one-hot column
    edge_i = edge_index[0].astype(jnp.int32).reshape(1, E)
    edge_j = edge_index[1].astype(jnp.int32).reshape(1, E)
    edge_attr_t = edge_attr.astype(f32).T                                             # (4, E)
    if pad:
        edge_i = jnp.concatenate([edge_i, jnp.full((1, pad), -1, jnp.int32)], axis=1)
        edge_j = jnp.concatenate([edge_j, jnp.full((1, pad), -1, jnp.int32)], axis=1)
        edge_attr_t = jnp.concatenate([edge_attr_t, jnp.zeros((IN_EDGE_NF, pad), f32)], axis=1)

    edge_cost = pl.CostEstimate(
        flops=int(2 * E_pad * N * (2 * GATH_F + ACC_F) + 2 * E_pad * 160
                  + 4 * NC * N * IN_NODE_NF * H_NF),
        transcendentals=int(2 * E_pad),
        bytes_accessed=int(4 * (E_pad * (2 + IN_EDGE_NF + F_EDGE_OUT)
                                + NC * N * ACC_F + N * NODE_TBL_F
                                + _SLAB_ROWS * _SLAB_COLS)),
    )

    edge_slab_t, part_acc = pl.pallas_call(
        _edge_kernel,
        out_shape=(
            jax.ShapeDtypeStruct((F_EDGE_OUT, E_pad), f32),
            jax.ShapeDtypeStruct((NC, N, ACC_F), f32),
        ),
        grid=(NC, n_per_core),
        in_specs=[
            pl.BlockSpec((1, TE), lambda c, e: (0, c * n_per_core + e)),              # edge_i
            pl.BlockSpec((1, TE), lambda c, e: (0, c * n_per_core + e)),              # edge_j
            pl.BlockSpec((IN_EDGE_NF, TE), lambda c, e: (0, c * n_per_core + e)),     # edge_attr^T
            pl.BlockSpec((NODE_TBL_F, N), lambda c, e: (0, 0)),                       # node table^T
            pl.BlockSpec((_SLAB_ROWS, _SLAB_COLS), lambda c, e: (0, 0)),              # weight slab
        ],
        out_specs=(
            pl.BlockSpec((F_EDGE_OUT, TE), lambda c, e: (0, c * n_per_core + e)),     # edge slab^T
            pl.BlockSpec((1, N, ACC_F), lambda c, e: (c, 0, 0)),                      # partial acc
        ),
        scratch_shapes=[pltpu.VMEM((GATH_F, N), MXU_DTYPE),                           # P_i table
                        pltpu.VMEM((GATH_F, N), MXU_DTYPE)],                          # P_j table
        compiler_params=pltpu.CompilerParams(
            dimension_semantics=("parallel", "arbitrary"),
            vmem_limit_bytes=vmem_limit),
        cost_estimate=edge_cost,
    )(edge_i, edge_j, edge_attr_t, node_tbl_t, wslab)

    node_cost = pl.CostEstimate(
        flops=int(2 * N * 256 + 2 * N * B * (EMB_NF + 1)),
        transcendentals=int(B),
        bytes_accessed=int(4 * (N * (NODE_TBL_F + 1 + F_NODE_OUT) + NC * N * ACC_F
                                + _SLAB_ROWS * _SLAB_COLS + B * EMB_NF)),
    )
    node_slab, graph_emb = pl.pallas_call(
        _node_kernel,
        out_shape=(
            jax.ShapeDtypeStruct((N, F_NODE_OUT), f32),
            jax.ShapeDtypeStruct((B, EMB_NF), f32),
        ),
        grid=(1,),
        in_specs=[
            pl.BlockSpec((N, NODE_TBL_F), lambda i: (0, 0)),
            pl.BlockSpec((N, 1), lambda i: (0, 0)),
            pl.BlockSpec((_SLAB_ROWS, _SLAB_COLS), lambda i: (0, 0)),
            pl.BlockSpec((NC, N, ACC_F), lambda i: (0, 0, 0)),
        ],
        out_specs=(
            pl.BlockSpec((N, F_NODE_OUT), lambda i: (0, 0)),
            pl.BlockSpec((B, EMB_NF), lambda i: (0, 0)),
        ),
        compiler_params=pltpu.CompilerParams(
            dimension_semantics=("arbitrary",),
            vmem_limit_bytes=vmem_limit),
        cost_estimate=node_cost,
    )(node_tbl, batch, wslab, part_acc)

    node_emb = node_slab[:, :EMB_NF]
    recon_node = node_slab[:, EMB_NF:EMB_NF + IN_NODE_NF]
    coord_out = node_slab[:, EMB_NF + IN_NODE_NF:]
    edge_emb = edge_slab_t[:EMB_NF, :E].T
    recon_edge = edge_slab_t[EMB_NF:, :E].T

    # ---- adjacency decoder, tiled over (i, j) node blocks ----
    TI = adj_tile_i if adj_tile_i is not None else _pick_div(N, (256, 128))
    TJ = adj_tile_j if adj_tile_j is not None else _pick_div(N, (1024, 512, 256, 128))
    assert TI == N or (N % TI == 0 and TI % 8 == 0), "bad adjacency row tile"
    assert TJ == N or (N % TJ == 0 and TJ % 128 == 0), "bad adjacency col tile"

    adj_cost = pl.CostEstimate(
        flops=int(2 * N * N * (EMB_NF + 2)),
        transcendentals=int(N * N),
        bytes_accessed=int(4 * (N * N + 2 * N * EMB_NF)),
    )
    adj = pl.pallas_call(
        _adj_kernel,
        out_shape=jax.ShapeDtypeStruct((N, N), f32),
        grid=(N // TI, N // TJ),
        in_specs=[
            pl.BlockSpec((TI, EMB_NF), lambda i, j: (i, 0)),
            pl.BlockSpec((TJ, EMB_NF), lambda i, j: (j, 0)),
            pl.BlockSpec(memory_space=pltpu.MemorySpace.SMEM),      # W scalar
            pl.BlockSpec(memory_space=pltpu.MemorySpace.SMEM),      # b scalar
        ],
        out_specs=pl.BlockSpec((TI, TJ), lambda i, j: (i, j)),
        compiler_params=pltpu.CompilerParams(
            dimension_semantics=("parallel", "parallel"),
            vmem_limit_bytes=vmem_limit),
        cost_estimate=adj_cost,
    )(node_emb, node_emb, params["w_adj"], params["b_adj"])

    return node_emb, edge_emb, recon_node, recon_edge, adj, coord_out, graph_emb


# ---------------------------------------------------------------------------
# Pure-JAX reference (gather / scatter-add form, mirrors the kernel's bf16 rounding
# of the projected/gathered/scattered values so tolerances stay tight).
# ---------------------------------------------------------------------------
def reference_forward(params, node_feats, edge_index, edge_attr, coords,
                      node_batch_vec, num_graphs):
    f32 = jnp.float32
    p = params

    def rnd(x):
        return x.astype(MXU_DTYPE).astype(f32)

    ei, ej = edge_index[0], edge_index[1]
    N = node_feats.shape[0]
    nf = node_feats.astype(f32)
    coords32 = coords.astype(f32)

    # first-layer node projections are folded into the gather table (rounded like the kernel)
    proj_i = rnd(nf @ p["we1_i"])
    proj_j = rnd(nf @ p["we1_j"])
    c_rnd = rnd(coords32)

    h_i, h_j = proj_i[ei], proj_j[ej]
    c_i, c_j = c_rnd[ei], c_rnd[ej]
    cd = c_i - c_j
    radial = jnp.sum(cd * cd, axis=1, keepdims=True)
    normed = cd / (jnp.sqrt(radial) + 1.0)

    h = jax.nn.relu(h_i + h_j + edge_attr.astype(f32) @ p["we1_e"]
                    + radial * p["we1_r"] + p["be1"])
    edge_out = h @ p["we2"] + p["be2"]

    h_c = jax.nn.relu(edge_out @ p["wc1"] + p["bc1"])
    e_c = h_c @ p["wc2"].T
    trans = normed * e_c

    agg_t = jnp.zeros((N, COORD_DIM), f32).at[ei].add(rnd(trans))
    agg_e = jnp.zeros((N, IN_EDGE_NF), f32).at[ei].add(rnd(edge_out))
    coords_new = coords32 + agg_t
    coord_out = coords_new @ p["wcm"] + p["bcm"]

    wn1 = jnp.concatenate([p["wn1_x"], p["wn1_a"], p["wn1_c"]], axis=0)
    node_in = jnp.concatenate([nf, agg_e, coord_out], axis=1)
    hn = jax.nn.relu(node_in @ wn1 + p["bn1"])
    node_out = hn @ p["wn2"] + p["bn2"]

    node_emb = node_out @ p["w_no2e"] + p["b_no2e"]
    edge_emb = edge_out @ p["w_eo2e"] + p["b_eo2e"]
    recon_node = node_emb @ p["w_ne2f"] + p["b_ne2f"]
    recon_edge = edge_emb @ p["w_ee2f"] + p["b_ee2f"]

    diff = node_emb[None, :, :] - node_emb[:, None, :]
    dist2 = jnp.sum(diff * diff, axis=-1)
    adj = jax.nn.sigmoid(p["w_adj"][0, 0] * dist2 + p["b_adj"][0, 0])
    adj = adj * (1.0 - jnp.eye(N, dtype=f32))

    b = node_batch_vec
    sums = jnp.zeros((num_graphs, EMB_NF), f32).at[b].add(node_emb)
    counts = jnp.zeros((num_graphs, 1), f32).at[b].add(1.0)
    graph_emb = sums / jnp.maximum(counts, 1.0)
    return node_emb, edge_emb, recon_node, recon_edge, adj, coord_out, graph_emb


if __name__ == "__main__":
    key = jax.random.PRNGKey(0)
    k1, k2, k3, k4, kp = jax.random.split(key, 5)

    N, E, G = 16, 200, 2  # nodes, edges, graphs
    node_feats = jax.random.normal(k1, (N, IN_NODE_NF), jnp.float32)
    edge_attr = jax.random.normal(k2, (E, IN_EDGE_NF), jnp.float32)
    coords = jax.random.normal(k3, (N, COORD_DIM), jnp.float32)
    edge_index = jax.random.randint(k4, (2, E), 0, N, jnp.int32)
    node_batch_vec = jnp.repeat(jnp.arange(G, dtype=jnp.int32), N // G)

    params = init_params(kp)

    outs = nec_ae_forward(params, node_feats, edge_index, edge_attr, coords,
                          node_batch_vec, G,
                          edge_tile=128, num_cores=2,     # 2 "cores" x 2 edge tiles each
                          adj_tile_i=8, adj_tile_j=N)     # 2x1 adjacency grid
    jax.block_until_ready(outs)
    node_emb, edge_emb, recon_node_fs, recon_edge_fs, adj_pred, coord_out, graph_emb = outs

    assert node_emb.shape == (N, EMB_NF)
    assert edge_emb.shape == (E, EMB_NF)
    assert recon_node_fs.shape == (N, IN_NODE_NF)
    assert recon_edge_fs.shape == (E, IN_EDGE_NF)
    assert adj_pred.shape == (N, N)
    assert coord_out.shape == (N, COORD_DIM)
    assert graph_emb.shape == (G, EMB_NF)

    refs = reference_forward(params, node_feats, edge_index, edge_attr, coords,
                             node_batch_vec, G)
    for got, want in zip(outs, refs):
        np.testing.assert_allclose(np.asarray(got), np.asarray(want), rtol=5e-2, atol=5e-2)

    print("KERNEL_OK")
</pallas_src>

<mosaic_0001>
module attributes {stable_mosaic.version = 11 : i64} {
  func.func @_edge_kernel(%arg0: i32, %arg1: i32, %arg2: memref<1x128xi32, #tpu.memory_space<vmem>>, %arg3: memref<1x128xi32, #tpu.memory_space<vmem>>, %arg4: memref<4x128xf32, #tpu.memory_space<vmem>>, %arg5: memref<14x16xf32, #tpu.memory_space<vmem>>, %arg6: memref<216x16xf32, #tpu.memory_space<vmem>>, %arg7: memref<6x128xf32, #tpu.memory_space<vmem>>, %arg8: memref<1x16x7xf32, #tpu.memory_space<vmem>>, %arg9: memref<7x16xbf16, #tpu.memory_space<vmem>>, %arg10: memref<7x16xbf16, #tpu.memory_space<vmem>>) attributes {dimension_semantics = [#tpu.dimension_semantics<parallel>, #tpu.dimension_semantics<arbitrary>], iteration_bounds = array<i64: 2, 1>, scalar_prefetch = 0 : i64, scratch_operands = 2 : i64, tpu.core_type = #tpu.core_type<tc>, window_params = [{transform_indices = @transform_0, window_bounds = array<i64: 1, 128>}, {transform_indices = @transform_1, window_bounds = array<i64: 1, 128>}, {transform_indices = @transform_2, window_bounds = array<i64: 4, 128>}, {pipeline_mode = #tpu.pipeline_mode<synchronous>, transform_indices = @transform_3, window_bounds = array<i64: 14, 16>}, {pipeline_mode = #tpu.pipeline_mode<synchronous>, transform_indices = @transform_4, window_bounds = array<i64: 216, 16>}, {transform_indices = @transform_5, window_bounds = array<i64: 6, 128>}, {transform_indices = @transform_6, window_bounds = array<i64: 1, 16, 7>}]} {
    %c0_i32 = arith.constant 0 : i32
    %0 = arith.cmpi eq, %arg1, %c0_i32 : i32
    %1 = arith.extui %0 : i1 to i32
    %c0_i32_0 = arith.constant 0 : i32
    %2 = arith.cmpi ne, %1, %c0_i32_0 : i32
    scf.if %2 {
      %c0_42 = arith.constant 0 : index
      %c0_43 = arith.constant 0 : index
      %87 = vector.load %arg5[%c0_42, %c0_43] : memref<14x16xf32, #tpu.memory_space<vmem>>, vector<11x16xf32>
      %c11 = arith.constant 11 : index
      %c0_44 = arith.constant 0 : index
      %88 = vector.load %arg5[%c11, %c0_44] : memref<14x16xf32, #tpu.memory_space<vmem>>, vector<3x16xf32>
      %c0_45 = arith.constant 0 : index
      %c0_46 = arith.constant 0 : index
      %89 = vector.load %arg6[%c0_45, %c0_46] : memref<216x16xf32, #tpu.memory_space<vmem>>, vector<4x11xf32>
      %cst_47 = arith.constant dense<0.000000e+00> : vector<4x16xf32>
      %90 = tpu.matmul %89, %87, %cst_47 {dimension_numbers = #tpu.dot_dimension_numbers<[1], [0], [0], [1], [0, 0, 1, 1], [], []>} : vector<4x11xf32>, vector<11x16xf32>, vector<4x16xf32> -> vector<4x16xf32>
      %91 = tpu.concatenate %90, %88 in 0 : vector<4x16xf32>, vector<3x16xf32> -> vector<7x16xf32>
      %92 = arith.truncf %91 : vector<7x16xf32> to vector<7x16xbf16>
      %c0_48 = arith.constant 0 : index
      %c0_49 = arith.constant 0 : index
      %93 = vector.load %arg9[%c0_48, %c0_49] : memref<7x16xbf16, #tpu.memory_space<vmem>>, vector<7x16xbf16>
      tpu.vector_store %arg9[%c0_48, %c0_49], %92 {strides = array<i32>} : memref<7x16xbf16, #tpu.memory_space<vmem>>, vector<7x16xbf16>,
      %c8 = arith.constant 8 : index
      %c0_50 = arith.constant 0 : index
      %94 = vector.load %arg6[%c8, %c0_50] : memref<216x16xf32, #tpu.memory_space<vmem>>, vector<4x11xf32>
      %cst_51 = arith.constant dense<0.000000e+00> : vector<4x16xf32>
      %95 = tpu.matmul %94, %87, %cst_51 {dimension_numbers = #tpu.dot_dimension_numbers<[1], [0], [0], [1], [0, 0, 1, 1], [], []>} : vector<4x11xf32>, vector<11x16xf32>, vector<4x16xf32> -> vector<4x16xf32>
      %96 = tpu.concatenate %95, %88 in 0 : vector<4x16xf32>, vector<3x16xf32> -> vector<7x16xf32>
      %97 = arith.truncf %96 : vector<7x16xf32> to vector<7x16xbf16>
      %c0_52 = arith.constant 0 : index
      %c0_53 = arith.constant 0 : index
      %98 = vector.load %arg10[%c0_52, %c0_53] : memref<7x16xbf16, #tpu.memory_space<vmem>>, vector<7x16xbf16>
      tpu.vector_store %arg10[%c0_52, %c0_53], %97 {strides = array<i32>} : memref<7x16xbf16, #tpu.memory_space<vmem>>, vector<7x16xbf16>,
      %cst_54 = arith.constant 0.000000e+00 : f32
      %99 = vector.broadcast %cst_54 : f32 to vector<1x16x7xf32>
      %c0_55 = arith.constant 0 : index
      %c0_56 = arith.constant 0 : index
      %c0_57 = arith.constant 0 : index
      %100 = vector.load %arg8[%c0_55, %c0_56, %c0_57] : memref<1x16x7xf32, #tpu.memory_space<vmem>>, vector<1x16x7xf32>
      tpu.vector_store %arg8[%c0_55, %c0_56, %c0_57], %99 {strides = array<i32>} : memref<1x16x7xf32, #tpu.memory_space<vmem>>, vector<1x16x7xf32>,
    } else {
    }
    %3 = tpu.iota {dimensions = array<i32: 0>} : vector<16x128xi32>
    %c0 = arith.constant 0 : index
    %c0_1 = arith.constant 0 : index
    %4 = vector.load %arg2[%c0, %c0_1] : memref<1x128xi32, #tpu.memory_space<vmem>>, vector<1x128xi32>
    %5 = vector.broadcast %4 : vector<1x128xi32> to vector<16x128xi32>
    %6 = arith.cmpi eq, %5, %3 : vector<16x128xi32>
    %7 = arith.extui %6 : vector<16x128xi1> to vector<16x128xi32>
    %8 = arith.sitofp %7 : vector<16x128xi32> to vector<16x128xf32>
    %9 = arith.truncf %8 : vector<16x128xf32> to vector<16x128xbf16>
    %c0_2 = arith.constant 0 : index
    %c0_3 = arith.constant 0 : index
    %10 = vector.load %arg3[%c0_2, %c0_3] : memref<1x128xi32, #tpu.memory_space<vmem>>, vector<1x128xi32>
    %11 = vector.broadcast %10 : vector<1x128xi32> to vector<16x128xi32>
    %12 = arith.cmpi eq, %11, %3 : vector<16x128xi32>
    %13 = arith.extui %12 : vector<16x128xi1> to vector<16x128xi32>
    %14 = arith.sitofp %13 : vector<16x128xi32> to vector<16x128xf32>
    %15 = arith.truncf %14 : vector<16x128xf32> to vector<16x128xbf16>
    %c0_4 = arith.constant 0 : index
    %c0_5 = arith.constant 0 : index
    %16 = vector.load %arg9[%c0_4, %c0_5] : memref<7x16xbf16, #tpu.memory_space<vmem>>, vector<7x16xbf16>
    %cst = arith.constant dense<0.000000e+00> : vector<7x128xf32>
    %17 = tpu.matmul %16, %9, %cst {dimension_numbers = #tpu.dot_dimension_numbers<[1], [0], [0], [1], [0, 0, 1, 1], [], []>} : vector<7x16xbf16>, vector<16x128xbf16>, vector<7x128xf32> -> vector<7x128xf32>
    %c0_6 = arith.constant 0 : index
    %c0_7 = arith.constant 0 : index
    %18 = vector.load %arg10[%c0_6, %c0_7] : memref<7x16xbf16, #tpu.memory_space<vmem>>, vector<7x16xbf16>
    %cst_8 = arith.constant dense<0.000000e+00> : vector<7x128xf32>
    %19 = tpu.matmul %18, %15, %cst_8 {dimension_numbers = #tpu.dot_dimension_numbers<[1], [0], [0], [1], [0, 0, 1, 1], [], []>} : vector<7x16xbf16>, vector<16x128xbf16>, vector<7x128xf32> -> vector<7x128xf32>
    %20 = vector.extract_strided_slice %17 {offsets = [0, 0], sizes = [4, 128], strides = [1, 1]} : vector<7x128xf32> to vector<4x128xf32>
    %21 = vector.extract_strided_slice %17 {offsets = [4, 0], sizes = [3, 128], strides = [1, 1]} : vector<7x128xf32> to vector<3x128xf32>
    %22 = vector.extract_strided_slice %19 {offsets = [0, 0], sizes = [4, 128], strides = [1, 1]} : vector<7x128xf32> to vector<4x128xf32>
    %23 = vector.extract_strided_slice %19 {offsets = [4, 0], sizes = [3, 128], strides = [1, 1]} : vector<7x128xf32> to vector<3x128xf32>
    %24 = arith.subf %21, %23 : vector<3x128xf32>
    %25 = arith.mulf %24, %24 : vector<3x128xf32>
    %cst_9 = arith.constant dense<0.000000e+00> : vector<128xf32>
    %26 = vector.multi_reduction <add>, %25, %cst_9 [0] : vector<3x128xf32> to vector<128xf32>
    %27 = vector.shape_cast %26 : vector<128xf32> to vector<1x128xf32>
    %28 = math.sqrt %27 : vector<1x128xf32>
    %cst_10 = arith.constant 1.000000e+00 : f32
    %29 = vector.broadcast %cst_10 : f32 to vector<1x128xf32>
    %30 = arith.addf %28, %29 : vector<1x128xf32>
    %31 = tpu.reciprocal %30 {approx = true} : vector<1x128xf32> -> vector<1x128xf32>
    %32 = vector.broadcast %31 : vector<1x128xf32> to vector<3x128xf32>
    %33 = arith.mulf %24, %32 : vector<3x128xf32>
    %34 = arith.addf %20, %22 : vector<4x128xf32>
    %c16 = arith.constant 16 : index
    %c0_11 = arith.constant 0 : index
    %35 = vector.load %arg6[%c16, %c0_11] : memref<216x16xf32, #tpu.memory_space<vmem>>, vector<4x4xf32>
    %c0_12 = arith.constant 0 : index
    %c0_13 = arith.constant 0 : index
    %36 = vector.load %arg4[%c0_12, %c0_13] : memref<4x128xf32, #tpu.memory_space<vmem>>, vector<4x128xf32>
    %cst_14 = arith.constant dense<0.000000e+00> : vector<4x128xf32>
    %37 = tpu.matmul %35, %36, %cst_14 {dimension_numbers = #tpu.dot_dimension_numbers<[1], [0], [0], [1], [0, 0, 1, 1], [], []>} : vector<4x4xf32>, vector<4x128xf32>, vector<4x128xf32> -> vector<4x128xf32>
    %38 = arith.addf %34, %37 : vector<4x128xf32>
    %c24 = arith.constant 24 : index
    %c0_15 = arith.constant 0 : index
    %39 = vector.load %arg6[%c24, %c0_15] : memref<216x16xf32, #tpu.memory_space<vmem>>, vector<4x1xf32>
    %40 = vector.broadcast %39 : vector<4x1xf32> to vector<4x128xf32>
    %41 = vector.broadcast %27 : vector<1x128xf32> to vector<4x128xf32>
    %42 = arith.mulf %40, %41 : vector<4x128xf32>
    %43 = arith.addf %38, %42 : vector<4x128xf32>
    %c32 = arith.constant 32 : index
    %c0_16 = arith.constant 0 : index
    %44 = vector.load %arg6[%c32, %c0_16] : memref<216x16xf32, #tpu.memory_space<vmem>>, vector<4x1xf32>
    %45 = vector.broadcast %44 : vector<4x1xf32> to vector<4x128xf32>
    %46 = arith.addf %43, %45 : vector<4x128xf32>
    %cst_17 = arith.constant 0.000000e+00 : f32
    %47 = vector.broadcast %cst_17 : f32 to vector<4x128xf32>
    %48 = arith.maximumf %46, %47 : vector<4x128xf32>
    %c40 = arith.constant 40 : index
    %c0_18 = arith.constant 0 : index
    %49 = vector.load %arg6[%c40, %c0_18] : memref<216x16xf32, #tpu.memory_space<vmem>>, vector<4x4xf32>
    %cst_19 = arith.constant dense<0.000000e+00> : vector<4x128xf32>
    %50 = tpu.matmul %49, %48, %cst_19 {dimension_numbers = #tpu.dot_dimension_numbers<[1], [0], [0], [1], [0, 0, 1, 1], [], []>} : vector<4x4xf32>, vector<4x128xf32>, vector<4x128xf32> -> vector<4x128xf32>
    %c48 = arith.constant 48 : index
    %c0_20 = arith.constant 0 : index
    %51 = vector.load %arg6[%c48, %c0_20] : memref<216x16xf32, #tpu.memory_space<vmem>>, vector<4x1xf32>
    %52 = vector.broadcast %51 : vector<4x1xf32> to vector<4x128xf32>
    %53 = arith.addf %50, %52 : vector<4x128xf32>
    %c56 = arith.constant 56 : index
    %c0_21 = arith.constant 0 : index
    %54 = vector.load %arg6[%c56, %c0_21] : memref<216x16xf32, #tpu.memory_space<vmem>>, vector<2x4xf32>
    %cst_22 = arith.constant dense<0.000000e+00> : vector<2x128xf32>
    %55 = tpu.matmul %54, %53, %cst_22 {dimension_numbers = #tpu.dot_dimension_numbers<[1], [0], [0], [1], [0, 0, 1, 1], [], []>} : vector<2x4xf32>, vector<4x128xf32>, vector<2x128xf32> -> vector<2x128xf32>
    %c64 = arith.constant 64 : index
    %c0_23 = arith.constant 0 : index
    %56 = vector.load %arg6[%c64, %c0_23] : memref<216x16xf32, #tpu.memory_space<vmem>>, vector<2x1xf32>
    %57 = vector.broadcast %56 : vector<2x1xf32> to vector<2x128xf32>
    %58 = arith.addf %55, %57 : vector<2x128xf32>
    %cst_24 = arith.constant 0.000000e+00 : f32
    %59 = vector.broadcast %cst_24 : f32 to vector<2x128xf32>
    %60 = arith.maximumf %58, %59 : vector<2x128xf32>
    %c72 = arith.constant 72 : index
    %c0_25 = arith.constant 0 : index
    %61 = vector.load %arg6[%c72, %c0_25] : memref<216x16xf32, #tpu.memory_space<vmem>>, vector<2x1xf32>
    %62 = vector.broadcast %61 : vector<2x1xf32> to vector<2x128xf32>
    %63 = arith.mulf %60, %62 : vector<2x128xf32>
    %cst_26 = arith.constant dense<0.000000e+00> : vector<128xf32>
    %64 = vector.multi_reduction <add>, %63, %cst_26 [0] : vector<2x128xf32> to vector<128xf32>
    %65 = vector.shape_cast %64 : vector<128xf32> to vector<1x128xf32>
    %66 = vector.broadcast %65 : vector<1x128xf32> to vector<3x128xf32>
    %67 = arith.mulf %33, %66 : vector<3x128xf32>
    %68 = tpu.concatenate %67, %53 in 0 : vector<3x128xf32>, vector<4x128xf32> -> vector<7x128xf32>
    %69 = arith.truncf %68 : vector<7x128xf32> to vector<7x128xbf16>
    %c0_27 = arith.constant 0 : index
    %c0_28 = arith.constant 0 : index
    %c0_29 = arith.constant 0 : index
    %70 = vector.load %arg8[%c0_27, %c0_28, %c0_29] : memref<1x16x7xf32, #tpu.memory_space<vmem>>, vector<1x16x7xf32>
    %cst_30 = arith.constant dense<0.000000e+00> : vector<16x7xf32>
    %71 = tpu.matmul %9, %69, %cst_30 {dimension_numbers = #tpu.dot_dimension_numbers<[1], [1], [0], [0], [0, 0, 1, 0], [], []>} : vector<16x128xbf16>, vector<7x128xbf16>, vector<16x7xf32> -> vector<16x7xf32>
    %72 = vector.shape_cast %71 : vector<16x7xf32> to vector<1x16x7xf32>
    %73 = arith.addf %70, %72 : vector<1x16x7xf32>
    %c0_31 = arith.constant 0 : index
    %c0_32 = arith.constant 0 : index
    %c0_33 = arith.constant 0 : index
    %74 = vector.load %arg8[%c0_31, %c0_32, %c0_33] : memref<1x16x7xf32, #tpu.memory_space<vmem>>, vector<1x16x7xf32>
    tpu.vector_store %arg8[%c0_31, %c0_32, %c0_33], %73 {strides = array<i32>} : memref<1x16x7xf32, #tpu.memory_space<vmem>>, vector<1x16x7xf32>,
    %c80 = arith.constant 80 : index
    %c0_34 = arith.constant 0 : index
    %75 = vector.load %arg6[%c80, %c0_34] : memref<216x16xf32, #tpu.memory_space<vmem>>, vector<2x4xf32>
    %cst_35 = arith.constant dense<0.000000e+00> : vector<2x128xf32>
    %76 = tpu.matmul %75, %53, %cst_35 {dimension_numbers = #tpu.dot_dimension_numbers<[1], [0], [0], [1], [0, 0, 1, 1], [], []>} : vector<2x4xf32>, vector<4x128xf32>, vector<2x128xf32> -> vector<2x128xf32>
    %c88 = arith.constant 88 : index
    %c0_36 = arith.constant 0 : index
    %77 = vector.load %arg6[%c88, %c0_36] : memref<216x16xf32, #tpu.memory_space<vmem>>, vector<2x1xf32>
    %78 = vector.broadcast %77 : vector<2x1xf32> to vector<2x128xf32>
    %79 = arith.addf %76, %78 : vector<2x128xf32>
    %c96 = arith.constant 96 : index
    %c0_37 = arith.constant 0 : index
    %80 = vector.load %arg6[%c96, %c0_37] : memref<216x16xf32, #tpu.memory_space<vmem>>, vector<4x2xf32>
    %cst_38 = arith.constant dense<0.000000e+00> : vector<4x128xf32>
    %81 = tpu.matmul %80, %79, %cst_38 {dimension_numbers = #tpu.dot_dimension_numbers<[1], [0], [0], [1], [0, 0, 1, 1], [], []>} : vector<4x2xf32>, vector<2x128xf32>, vector<4x128xf32> -> vector<4x128xf32>
    %c104 = arith.constant 104 : index
    %c0_39 = arith.constant 0 : index
    %82 = vector.load %arg6[%c104, %c0_39] : memref<216x16xf32, #tpu.memory_space<vmem>>, vector<4x1xf32>
    %83 = vector.broadcast %82 : vector<4x1xf32> to vector<4x128xf32>
    %84 = arith.addf %81, %83 : vector<4x128xf32>
    %85 = tpu.concatenate %79, %84 in 0 : vector<2x128xf32>, vector<4x128xf32> -> vector<6x128xf32>
    %c0_40 = arith.constant 0 : index
    %c0_41 = arith.constant 0 : index
    %86 = vector.load %arg7[%c0_40, %c0_41] : memref<6x128xf32, #tpu.memory_space<vmem>>, vector<6x128xf32>
    tpu.vector_store %arg7[%c0_40, %c0_41], %85 {strides = array<i32>} : memref<6x128xf32, #tpu.memory_space<vmem>>, vector<6x128xf32>,
    return
  }
  func.func @transform_0(%arg0: i32, %arg1: i32) -> (i32, i32) {
    %c1_i32 = arith.constant 1 : i32
    %0 = arith.muli %arg0, %c1_i32 : i32
    %1 = arith.addi %0, %arg1 : i32
    %c0_i32 = arith.constant 0 : i32
    %c0_i32_0 = arith.constant 0 : i32
    return %c0_i32, %1 : i32, i32
  }
  func.func @transform_1(%arg0: i32, %arg1: i32) -> (i32, i32) {
    %c1_i32 = arith.constant 1 : i32
    %0 = arith.muli %arg0, %c1_i32 : i32
    %1 = arith.addi %0, %arg1 : i32
    %c0_i32 = arith.constant 0 : i32
    %c0_i32_0 = arith.constant 0 : i32
    return %c0_i32, %1 : i32, i32
  }
  func.func @transform_2(%arg0: i32, %arg1: i32) -> (i32, i32) {
    %c1_i32 = arith.constant 1 : i32
    %0 = arith.muli %arg0, %c1_i32 : i32
    %1 = arith.addi %0, %arg1 : i32
    %c0_i32 = arith.constant 0 : i32
    %c0_i32_0 = arith.constant 0 : i32
    return %c0_i32, %1 : i32, i32
  }
  func.func @transform_3(%arg0: i32, %arg1: i32) -> (i32, i32) {
    %c0_i32 = arith.constant 0 : i32
    %c0_i32_0 = arith.constant 0 : i32
    %c0_i32_1 = arith.constant 0 : i32
    return %c0_i32, %c0_i32_0 : i32, i32
  }
  func.func @transform_4(%arg0: i32, %arg1: i32) -> (i32, i32) {
    %c0_i32 = arith.constant 0 : i32
    %c0_i32_0 = arith.constant 0 : i32
    %c0_i32_1 = arith.constant 0 : i32
    return %c0_i32, %c0_i32_0 : i32, i32
  }
  func.func @transform_5(%arg0: i32, %arg1: i32) -> (i32, i32) {
    %c1_i32 = arith.constant 1 : i32
    %0 = arith.muli %arg0, %c1_i32 : i32
    %1 = arith.addi %0, %arg1 : i32
    %c0_i32 = arith.constant 0 : i32
    %c0_i32_0 = arith.constant 0 : i32
    return %c0_i32, %1 : i32, i32
  }
  func.func @transform_6(%arg0: i32, %arg1: i32) -> (i32, i32, i32) {
    %c0_i32 = arith.constant 0 : i32
    %c0_i32_0 = arith.constant 0 : i32
    %c0_i32_1 = arith.constant 0 : i32
    return %arg0, %c0_i32, %c0_i32_0 : i32, i32, i32
  }
}

</mosaic_0001>

<llo_original>
// kernel: tpu_custom_call.1
$region0: #{tpu_custom_call.1}
  #allocation0 [shape = 'u32[]', space=smem, size = 0x4, offset = 0x4, fixed_abs, tag = 'smem constant byte address 0x4 - core index']
  #allocation1 [shape = 'u32[144,128]{1,0:T(1,128)}', space=vmem, size = 0x12000, scoped, tag = 'internal scratch']
  #allocation2 [shape = 'bf16[7,16]{1,0:T(8,128)(2,1)}', space=vmem, size = 0x800, scoped, tag = 'scratch operand']
  #allocation3 [shape = 'bf16[7,16]{1,0:T(8,128)(2,1)}', space=vmem, size = 0x800, scoped, tag = 'scratch operand']
  %s0 = inlined_call_operand.hbm [shape: s32[1,256], index: 0, kind: input, shape index: {}]
  %s1 = inlined_call_operand.hbm [shape: s32[1,256], index: 1, kind: input, shape index: {}]
  %s2 = inlined_call_operand.hbm [shape: f32[4,256], index: 2, kind: input, shape index: {}]
  %s3 = inlined_call_operand.hbm [shape: f32[14,16], index: 3, kind: input, shape index: {}]
  %s4 = inlined_call_operand.hbm [shape: f32[216,16], index: 4, kind: input, shape index: {}]
  %s5 = inlined_call_operand.hbm [shape: f32[6,256], index: 5, kind: output, shape index: {0}]
  %s6 = inlined_call_operand.hbm [shape: f32[2,16,7], index: 6, kind: output, shape index: {1}]
  %7 = xla_tuple %s5, %s6
  %s8 = sld [smem:[#allocation0]]
  $region85: #{tpu_custom_call.1} parent=0
    _
  %s10 = ssub.s32 1, %s8
  %s11 = scalar_select 0, %s10, %s8
  $region1: #{tpu_custom_call.1} parent=0
    #allocation4 [shape = 'u8[1024]{0}', space=vmem, size = 0x400, scoped, tag = 'input window, operand 0']
    #allocation5 [shape = 's32[2]{0}', space=sflag, size = 0x8, scoped, tag = 'scoped memory for tpu_custom_call.1']
    #allocation6 [shape = 's32[2]{0}', space=sflag, size = 0x8, scoped, tag = 'scoped memory for tpu_custom_call.1']
    #allocation7 [shape = 'u8[1024]{0}', space=vmem, size = 0x400, scoped, tag = 'input window, operand 1']
    #allocation8 [shape = 's32[2]{0}', space=sflag, size = 0x8, scoped, tag = 'scoped memory for tpu_custom_call.1']
    #allocation9 [shape = 'u8[4096]{0}', space=vmem, size = 0x1000, scoped, tag = 'input window, operand 2']
    #allocation10 [shape = 'u8[8192]{0}', space=vmem, size = 0x2000, scoped, tag = 'input window, operand 3, single buffered']
    #allocation11 [shape = 's32[1]{0}', space=sflag, size = 0x4, scoped, tag = 'scoped memory for tpu_custom_call.1']
    #allocation12 [shape = 'u8[110592]{0}', space=vmem, size = 0x1b000, scoped, tag = 'input window, operand 4, single buffered']
    #allocation13 [shape = 'u8[8192]{0}', space=vmem, size = 0x2000, scoped, tag = 'output window, operand 0']
    #allocation14 [shape = 'u8[16384]{0}', space=vmem, size = 0x4000, scoped, tag = 'output window, operand 1']
    #allocation15 [shape = 's32[2]{0}', space=sflag, size = 0x8, scoped, tag = 'scoped memory for tpu_custom_call.1']
    %12 = vsyncpa [#allocation5], 0
    %s13 = scalar_lea.sflag [#allocation5], 1
    %14 = vsyncpa %s13, 0
    %15 = vsyncpa [#allocation8], 0
    %s16 = scalar_lea.sflag [#allocation8], 1
    %17 = vsyncpa %s16, 0
    %18 = vsyncpa [#allocation11], 0
    %19 = vsyncpa [#allocation6], 0
    %s20 = scalar_lea.sflag [#allocation6], 1
    %21 = vsyncpa %s20, 0
    %22 = vsyncpa [#allocation15], 0
    %s23 = scalar_lea.sflag [#allocation15], 1
    %24 = vsyncpa %s23, 0
    loop: start=0, step=1, limit=4
    $region2: #{tpu_custom_call.1} parent=1 // loop_pre_header
      _
    $region3: #{tpu_custom_call.1} parent=1 // loop_header
      %s26 = sphi 0, %s30
      %p27 = scmp.ge.s32.totalorder %s26, 4
      %s33 = sphi 0, %s45
      %s34 = sphi 0, %s41
      %s35 = sphi 0, %s33
      %s36 = sphi 0, %s34
      %s37 = sphi 0, %s35
      %s38 = sphi 0, %s36
      %s50 = sphi 0, %s52
      %s53 = sphi 0, %s50
      %s54 = sphi 0, %s53
      %s70 = sphi 0, %s54
      %s78 = sphi 0, %s80
      %s81 = sphi 0, %s78
      %s82 = sphi 0, %s81
      %s98 = sphi 0, %s82
      %s106 = sphi 0, %s108
      %s109 = sphi 0, %s106
      %s110 = sphi 0, %s109
      %s126 = sphi 0, %s110
      %s130 = sphi 0, %s130
      %s132 = sphi 0, %s130
      %s133 = sphi 0, %s132
      %s147 = sphi 0, %s133
      %s151 = sphi 0, %s151
      %s153 = sphi 0, %s151
      %s154 = sphi 0, %s153
      %s168 = sphi 0, %s154
      %s176 = sphi 0, %s178
      %s179 = sphi 0, %s176
      %s180 = sphi 0, %s179
      %s196 = sphi 0, %s180
      %s202 = sphi 0, %s204
      %s205 = sphi 0, %s202
      %s206 = sphi 0, %s205
      %s222 = sphi 0, %s206
    $region4: #{tpu_custom_call.1} parent=1 // loop_header_branch
      %29 = sbr.rel (%p27) target = $region8
    $region5: #{tpu_custom_call.1} parent=1 // loop_body
      %s31 = ssub.s32 %s26, 1
      %s32 = ssub.s32 %s26, 2
      %s39 = sadd.s32 1, %s34
      %p40 = scmp.ge.s32.totalorder %s39, 1
      %s41 = scalar_select %p40, 0, %s39
      %s42 = sadd.s32 1, %s33
      %s43 = scalar_select %p40, %s42, %s33
      %p44 = scmp.ge.s32.totalorder %s43, 2
      %s45 = scalar_select %p44, 0, %s43
      %s46 = sadd.s32 %s33, %s34
      %s47 = sadd.s32 %s45, %s41
      %s48 = ssub.s32 %s46, %s47
      %p49 = scmp.eq.s32.totalorder %s48, 0
      %s51 = sadd.s32 %s50, 1
      %s52 = scalar_select %p49, %s50, %s51
      %p55 = pneg %p49
      %p56 = scmp.eq.s32.totalorder %s26, 1
      %p57 = por %p55, %p56
      %p58 = scmp.ne.s32.totalorder %s50, %s53
      %p59 = scmp.eq.s32.totalorder %s26, 0
      %p60 = por %p58, %p59
      %p61 = scmp.ne.s32.totalorder %s50, %s53
      %p62 = scmp.eq.s32.totalorder %s31, 1
      %p63 = por %p61, %p62
      %p64 = scmp.ne.s32.totalorder %s53, %s54
      %p65 = scmp.eq.s32.totalorder %s31, 0
      %p66 = por %p64, %p65
      %p67 = scmp.ne.s32.totalorder %s53, %s54
      %p68 = scmp.eq.s32.totalorder %s32, 1
      %p69 = por %p67, %p68
      %p71 = scmp.ne.s32.totalorder %s54, %s70
      %p72 = scmp.eq.s32.totalorder %s32, 0
      %p73 = por %p71, %p72
      %s74 = sadd.s32 %s33, %s34
      %s75 = sadd.s32 %s45, %s41
      %s76 = ssub.s32 %s74, %s75
      %p77 = scmp.eq.s32.totalorder %s76, 0
      %s79 = sadd.s32 %s78, 1
      %s80 = scalar_select %p77, %s78, %s79
      %p83 = pneg %p77
      %p84 = scmp.eq.s32.totalorder %s26, 1
      %p85 = por %p83, %p84
      %p86 = scmp.ne.s32.totalorder %s78, %s81
      %p87 = scmp.eq.s32.totalorder %s26, 0
      %p88 = por %p86, %p87
      %p89 = scmp.ne.s32.totalorder %s78, %s81
      %p90 = scmp.eq.s32.totalorder %s31, 1
      %p91 = por %p89, %p90
      %p92 = scmp.ne.s32.totalorder %s81, %s82
      %p93 = scmp.eq.s32.totalorder %s31, 0
      %p94 = por %p92, %p93
      %p95 = scmp.ne.s32.totalorder %s81, %s82
      %p96 = scmp.eq.s32.totalorder %s32, 1
      %p97 = por %p95, %p96
      %p99 = scmp.ne.s32.totalorder %s82, %s98
      %p100 = scmp.eq.s32.totalorder %s32, 0
      %p101 = por %p99, %p100
      %s102 = sadd.s32 %s33, %s34
      %s103 = sadd.s32 %s45, %s41
      %s104 = ssub.s32 %s102, %s103
      %p105 = scmp.eq.s32.totalorder %s104, 0
      %s107 = sadd.s32 %s106, 1
      %s108 = scalar_select %p105, %s106, %s107
      %p111 = pneg %p105
      %p112 = scmp.eq.s32.totalorder %s26, 1
      %p113 = por %p111, %p112
      %p114 = scmp.ne.s32.totalorder %s106, %s109
      %p115 = scmp.eq.s32.totalorder %s26, 0
      %p116 = por %p114, %p115
      %p117 = scmp.ne.s32.totalorder %s106, %s109
      %p118 = scmp.eq.s32.totalorder %s31, 1
      %p119 = por %p117, %p118
      %p120 = scmp.ne.s32.totalorder %s109, %s110
      %p121 = scmp.eq.s32.totalorder %s31, 0
      %p122 = por %p120, %p121
      %p123 = scmp.ne.s32.totalorder %s109, %s110
      %p124 = scmp.eq.s32.totalorder %s32, 1
      %p125 = por %p123, %p124
      %p127 = scmp.ne.s32.totalorder %s110, %s126
      %p128 = scmp.eq.s32.totalorder %s32, 0
      %p129 = por %p127, %p128
      %s131 = sadd.s32 %s130, 1
      %p134 = scmp.eq.s32.totalorder %s26, 1
      %p135 = scmp.ne.s32.totalorder %s130, %s132
      %p136 = scmp.eq.s32.totalorder %s26, 0
      %p137 = por %p135, %p136
      %p138 = scmp.ne.s32.totalorder %s130, %s132
      %p139 = scmp.eq.s32.totalorder %s31, 1
      %p140 = por %p138, %p139
      %p141 = scmp.ne.s32.totalorder %s132, %s133
      %p142 = scmp.eq.s32.totalorder %s31, 0
      %p143 = por %p141, %p142
      %p144 = scmp.ne.s32.totalorder %s132, %s133
      %p145 = scmp.eq.s32.totalorder %s32, 1
      %p146 = por %p144, %p145
      %p148 = scmp.ne.s32.totalorder %s133, %s147
      %p149 = scmp.eq.s32.totalorder %s32, 0
      %p150 = por %p148, %p149
      %s152 = sadd.s32 %s151, 1
      %p155 = scmp.eq.s32.totalorder %s26, 1
      %p156 = scmp.ne.s32.totalorder %s151, %s153
      %p157 = scmp.eq.s32.totalorder %s26, 0
      %p158 = por %p156, %p157
      %p159 = scmp.ne.s32.totalorder %s151, %s153
      %p160 = scmp.eq.s32.totalorder %s31, 1
      %p161 = por %p159, %p160
      %p162 = scmp.ne.s32.totalorder %s153, %s154
      %p163 = scmp.eq.s32.totalorder %s31, 0
      %p164 = por %p162, %p163
      %p165 = scmp.ne.s32.totalorder %s153, %s154
      %p166 = scmp.eq.s32.totalorder %s32, 1
      %p167 = por %p165, %p166
      %p169 = scmp.ne.s32.totalorder %s154, %s168
      %p170 = scmp.eq.s32.totalorder %s32, 0
      %p171 = por %p169, %p170
      %s172 = sadd.s32 %s33, %s34
      %s173 = sadd.s32 %s45, %s41
      %s174 = ssub.s32 %s172, %s173
      %p175 = scmp.eq.s32.totalorder %s174, 0
      %s177 = sadd.s32 %s176, 1
      %s178 = scalar_select %p175, %s176, %s177
      %p181 = pneg %p175
      %p182 = scmp.eq.s32.totalorder %s26, 1
      %p183 = por %p181, %p182
      %p184 = scmp.ne.s32.totalorder %s176, %s179
      %p185 = scmp.eq.s32.totalorder %s26, 0
      %p186 = por %p184, %p185
      %p187 = scmp.ne.s32.totalorder %s176, %s179
      %p188 = scmp.eq.s32.totalorder %s31, 1
      %p189 = por %p187, %p188
      %p190 = scmp.ne.s32.totalorder %s179, %s180
      %p191 = scmp.eq.s32.totalorder %s31, 0
      %p192 = por %p190, %p191
      %p193 = scmp.ne.s32.totalorder %s179, %s180
      %p194 = scmp.eq.s32.totalorder %s32, 1
      %p195 = por %p193, %p194
      %p197 = scmp.ne.s32.totalorder %s180, %s196
      %p198 = scmp.eq.s32.totalorder %s32, 0
      %p199 = por %p197, %p198
      %s200 = ssub.s32 %s33, %s45
      %p201 = scmp.eq.s32.totalorder %s200, 0
      %s203 = sadd.s32 %s202, 1
      %s204 = scalar_select %p201, %s202, %s203
      %p207 = pneg %p201
      %p208 = scmp.eq.s32.totalorder %s26, 1
      %p209 = por %p207, %p208
      %p210 = scmp.ne.s32.totalorder %s202, %s205
      %p211 = scmp.eq.s32.totalorder %s26, 0
      %p212 = por %p210, %p211
      %p213 = scmp.ne.s32.totalorder %s202, %s205
      %p214 = scmp.eq.s32.totalorder %s31, 1
      %p215 = por %p213, %p214
      %p216 = scmp.ne.s32.totalorder %s205, %s206
      %p217 = scmp.eq.s32.totalorder %s31, 0
      %p218 = por %p216, %p217
      %p219 = scmp.ne.s32.totalorder %s205, %s206
      %p220 = scmp.eq.s32.totalorder %s32, 1
      %p221 = por %p219, %p220
      %p223 = scmp.ne.s32.totalorder %s206, %s222
      %p224 = scmp.eq.s32.totalorder %s32, 0
      %p225 = por %p223, %p224
      %p226 = scmp.le.s32.totalorder 1, %s26
      %p227 = scmp.lt.s32.totalorder %s26, 3
      %p228 = pnand %p226, %p227
      %p229 = pneg %p228
      // Predicated region
      $region9: #{tpu_custom_call.1} parent=5 // pred_check
        _
      $region10: #{tpu_custom_call.1} parent=5 // pred_check_branch
        %231 = sbr.rel (%p228) target = $region12
      $region11: #{tpu_custom_call.1} parent=5 // pred_region
        %s232 = ssub.s32 %s26, 1
        // Predicated region
        $region13: #{tpu_custom_call.1} parent=11 // pred_check
          %p233 = pneg %p143
        $region14: #{tpu_custom_call.1} parent=11 // pred_check_branch
          %235 = sbr.rel (%p233) target = $region16
        $region15: #{tpu_custom_call.1} parent=11 // pred_region
          %s237 = ssub.s32 256, 256
          %238 = vsyncadd [#allocation11], %s237
          %s239 = sshll.u32 [#allocation10], 4
          %s240 = int_to_ptr.vmem [resolvable:$true] %s239
          %245 = dma.hbm_to_vmem [thread:$0]  %s3, 256, %s240, [#allocation11], 128, 128, 8
        $region16: #{tpu_custom_call.1} parent=11 // pred_fallthru
          _
        // Predicated region
        $region17: #{tpu_custom_call.1} parent=11 // pred_check
          %p246 = pneg %p164
        $region18: #{tpu_custom_call.1} parent=11 // pred_check_branch
          %248 = sbr.rel (%p246) target = $region20
        $region19: #{tpu_custom_call.1} parent=11 // pred_region
          %s250 = ssub.s32 3456, 3456
          %251 = vsyncadd [#allocation11], %s250
          %s252 = sshll.u32 [#allocation12], 4
          %s253 = int_to_ptr.vmem [resolvable:$true] %s252
          %258 = dma.hbm_to_vmem [thread:$0]  %s4, 3456, %s253, [#allocation11], 128, 128, 8
        $region20: #{tpu_custom_call.1} parent=11 // pred_fallthru
          _
      $region12: #{tpu_custom_call.1} parent=5 // pred_fallthru
        _
      %p259 = scmp.lt.s32.totalorder %s26, 2
      // Predicated region
      $region21: #{tpu_custom_call.1} parent=5 // pred_check
        %p260 = pneg %p259
      $region22: #{tpu_custom_call.1} parent=5 // pred_check_branch
        %262 = sbr.rel (%p260) target = $region24
      $region23: #{tpu_custom_call.1} parent=5 // pred_region
        // Predicated region
        $region25: #{tpu_custom_call.1} parent=23 // pred_check
          %p263 = pneg %p60
        $region26: #{tpu_custom_call.1} parent=23 // pred_check_branch
          %265 = sbr.rel (%p263) target = $region28
        $region27: #{tpu_custom_call.1} parent=23 // pred_region
          %s266 = sand.u32 %s50, 1
          %s267 = scalar_lea.sflag [#allocation5], %s266
          %s268 = sand.u32 %s50, 1
          %s269 = scalar_lea.vmem [#allocation4], %s268
          %s270 = sadd.s32 %s33, %s34
          %s272 = ssub.s32 16, 16
          %273 = vsyncadd %s267, %s272
          %s274 = smul.addr %s270, 16
          %s275 = scalar_lea.hbm %s0, %s274
          %s277 = sshll.u32 %s269, 4
          %s278 = int_to_ptr.vmem [resolvable:$true] %s277
          %280 = dma.hbm_to_vmem [thread:$0]  %s275, 16, %s278, %s267
        $region28: #{tpu_custom_call.1} parent=23 // pred_fallthru
          _
        // Predicated region
        $region29: #{tpu_custom_call.1} parent=23 // pred_check
          %p281 = pneg %p88
        $region30: #{tpu_custom_call.1} parent=23 // pred_check_branch
          %283 = sbr.rel (%p281) target = $region32
        $region31: #{tpu_custom_call.1} parent=23 // pred_region
          %s284 = sand.u32 %s26, 1
          %s285 = scalar_lea.sflag [#allocation8], %s284
          %s286 = sand.u32 %s78, 1
          %s287 = scalar_lea.vmem [#allocation7], %s286
          %s288 = sadd.s32 %s33, %s34
          %s290 = ssub.s32 16, 16
          %291 = vsyncadd %s285, %s290
          %s292 = smul.addr %s288, 16
          %s293 = scalar_lea.hbm %s1, %s292
          %s295 = sshll.u32 %s287, 4
          %s296 = int_to_ptr.vmem [resolvable:$true] %s295
          %298 = dma.hbm_to_vmem [thread:$0]  %s293, 16, %s296, %s285
        $region32: #{tpu_custom_call.1} parent=23 // pred_fallthru
          _
        // Predicated region
        $region33: #{tpu_custom_call.1} parent=23 // pred_check
          %p299 = pneg %p116
        $region34: #{tpu_custom_call.1} parent=23 // pred_check_branch
          %301 = sbr.rel (%p299) target = $region36
        $region35: #{tpu_custom_call.1} parent=23 // pred_region
          %s302 = sand.u32 %s26, 1
          %s303 = scalar_lea.sflag [#allocation8], %s302
          %s304 = sand.u32 %s106, 1
          %s305 = smul.addr %s304, 4
          %s306 = scalar_lea.vmem [#allocation9], %s305
          %s307 = sadd.s32 %s33, %s34
          %s309 = ssub.s32 64, 64
          %310 = vsyncadd %s303, %s309
          %s311 = smul.addr %s307, 64
          %s312 = scalar_lea.hbm %s2, %s311
          %s314 = sshll.u32 %s306, 4
          %s315 = int_to_ptr.vmem [resolvable:$true] %s314
          %317 = dma.hbm_to_vmem [thread:$0]  %s312, 64, %s315, %s303
        $region36: #{tpu_custom_call.1} parent=23 // pred_fallthru
          _
      $region24: #{tpu_custom_call.1} parent=5 // pred_fallthru
        _
      %p318 = scmp.le.s32.totalorder 1, %s26
      %p319 = scmp.lt.s32.totalorder %s26, 3
      %p320 = pnand %p318, %p319
      %p321 = pneg %p320
      // Predicated region
      $region37: #{tpu_custom_call.1} parent=5 // pred_check
        _
      $region38: #{tpu_custom_call.1} parent=5 // pred_check_branch
        %323 = sbr.rel (%p320) target = $region40
      $region39: #{tpu_custom_call.1} parent=5 // pred_region
        %s324 = ssub.s32 %s26, 1
        %s325 = sand.u32 %s53, 1
        %s326 = scalar_lea.sflag [#allocation5], %s325
        %s327 = sand.u32 %s53, 1
        %s328 = scalar_lea.vmem [#allocation4], %s327
        // Predicated region
        $region41: #{tpu_custom_call.1} parent=39 // pred_check
          %p329 = pneg %p66
        $region42: #{tpu_custom_call.1} parent=39 // pred_check_branch
          %331 = sbr.rel (%p329) target = $region44
        $region43: #{tpu_custom_call.1} parent=39 // pred_region
          %332 = dma.done %s326, 16
        $region44: #{tpu_custom_call.1} parent=39 // pred_fallthru
          _
        %s333 = sand.u32 %s31, 1
        %s334 = scalar_lea.sflag [#allocation8], %s333
        %s335 = sand.u32 %s81, 1
        %s336 = scalar_lea.vmem [#allocation7], %s335
        // Predicated region
        $region45: #{tpu_custom_call.1} parent=39 // pred_check
          %p337 = pneg %p94
        $region46: #{tpu_custom_call.1} parent=39 // pred_check_branch
          %339 = sbr.rel (%p337) target = $region48
        $region47: #{tpu_custom_call.1} parent=39 // pred_region
          %340 = dma.done %s334, 16
        $region48: #{tpu_custom_call.1} parent=39 // pred_fallthru
          _
        %s341 = sand.u32 %s31, 1
        %s342 = scalar_lea.sflag [#allocation8], %s341
        %s343 = sand.u32 %s109, 1
        %s344 = smul.addr %s343, 4
        %s345 = scalar_lea.vmem [#allocation9], %s344
        // Predicated region
        $region49: #{tpu_custom_call.1} parent=39 // pred_check
          %p346 = pneg %p122
        $region50: #{tpu_custom_call.1} parent=39 // pred_check_branch
          %348 = sbr.rel (%p346) target = $region52
        $region51: #{tpu_custom_call.1} parent=39 // pred_region
          %349 = dma.done %s342, 64
        $region52: #{tpu_custom_call.1} parent=39 // pred_fallthru
          _
        // Predicated region
        $region53: #{tpu_custom_call.1} parent=39 // pred_check
          %p350 = pneg %p143
        $region54: #{tpu_custom_call.1} parent=39 // pred_check_branch
          %352 = sbr.rel (%p350) target = $region56
        $region55: #{tpu_custom_call.1} parent=39 // pred_region
          %353 = dma.done [#allocation11], 256
        $region56: #{tpu_custom_call.1} parent=39 // pred_fallthru
          _
        // Predicated region
        $region57: #{tpu_custom_call.1} parent=39 // pred_check
          %p354 = pneg %p164
        $region58: #{tpu_custom_call.1} parent=39 // pred_check_branch
          %356 = sbr.rel (%p354) target = $region60
        $region59: #{tpu_custom_call.1} parent=39 // pred_region
          %357 = dma.done [#allocation11], 3456
        $region60: #{tpu_custom_call.1} parent=39 // pred_fallthru
          _
        %s358 = sand.u32 %s53, 1
        %s359 = scalar_lea.sflag [#allocation5], %s358
        %s360 = sand.u32 %s53, 1
        %s361 = scalar_lea.vmem [#allocation4], %s360
        %p362 = pneg %p66
        %p363 = pneg %p63
        %s364 = sand.u32 %s31, 1
        %s365 = scalar_lea.sflag [#allocation8], %s364
        %s366 = sand.u32 %s81, 1
        %s367 = scalar_lea.vmem [#allocation7], %s366
        %p368 = pneg %p94
        %p369 = pneg %p91
        %s370 = sand.u32 %s31, 1
        %s371 = scalar_lea.sflag [#allocation8], %s370
        %s372 = sand.u32 %s109, 1
        %s373 = smul.addr %s372, 4
        %s374 = scalar_lea.vmem [#allocation9], %s373
        %p375 = pneg %p122
        %p376 = pneg %p119
        %p377 = pneg %p143
        %p378 = pneg %p140
        %p379 = pneg %p164
        %p380 = pneg %p161
        %p381 = pneg %p192
        %p382 = pneg %p189
        %s383 = sand.u32 %s179, 1
        %s384 = scalar_lea.sflag [#allocation6], %s383
        %s385 = sand.u32 %s179, 1
        %s386 = smul.addr %s385, 8
        %s387 = scalar_lea.vmem [#allocation13], %s386
        %p388 = pneg %p218
        %p389 = pneg %p215
        %s390 = sand.u32 %s205, 1
        %s391 = scalar_lea.sflag [#allocation15], %s390
        %s392 = sand.u32 %s205, 1
        %s393 = smul.addr %s392, 16
        %s394 = scalar_lea.vmem [#allocation14], %s393
        %s395 = sadd.s32 %s35, %s36
        %s396 = sadd.s32 %s35, %s36
        %s397 = sadd.s32 %s35, %s36
        %s398 = sadd.s32 %s35, %s36
        %p400 = scmp.eq.s32.totalorder %s36, 0
        // Predicated region
        $region61: #{tpu_custom_call.1} parent=39 // pred_check
          %p401 = pneg %p400
        $region62: #{tpu_custom_call.1} parent=39 // pred_check_branch
          %403 = sbr.rel (%p401) target = $region64
        $region63: #{tpu_custom_call.1} parent=39 // pred_region
          %v404 = vld [vmem:[#allocation10] sm:$0xff]
          %v405 = vld [vmem:[#allocation10 + $0x8] sm:$0x7]
          %v406 = vld [vmem:[#allocation10 + $0xb] sm:$0x7]
          %v407 = vld [vmem:[#allocation12] sm:$0xf]
          %vm408 = vcmask 89088
          %v410 = vsel %vm408, %v407, 0
          %vm412 = vcmask 1042432
          %v414 = vsel %vm412, %v405, 0
          %416 = vmatprep.subr.mxu0 0.0
          %417 = vmatpush1.msra.mxu0 %v404
          %418 = vmatprep.subr.mxu0 0.0
          %419 = vmatpush1.msra.mxu0 %v414
          %420 = vmatprep.subr.mxu0 0.0
          %421 = vmatpush1.msra.mxu0 0.0
          %422 = vmatprep.subr.mxu0 0.0
          %423 = vmatpush1.msra.mxu0 0.0
          %424 = vmatprep.subr.mxu0 0.0
          %425 = vmatpush1.msra.mxu0 0.0
          %426 = vmatprep.subr.mxu0 0.0
          %427 = vmatpush1.msra.mxu0 0.0
          %428 = vmatprep.subr.mxu0 0.0
          %429 = vmatpush1.msra.mxu0 0.0
          %430 = vmatprep.subr.mxu0 0.0
          %431 = vmatpush1.msra.mxu0 0.0
          %432 = vmatprep.subr.mxu0 0.0
          %433 = vmatpush1.msra.mxu0 0.0
          %434 = vmatprep.subr.mxu0 0.0
          %435 = vmatpush1.msra.mxu0 0.0
          %436 = vmatprep.subr.mxu0 0.0
          %437 = vmatpush1.msra.mxu0 0.0
          %438 = vmatprep.subr.mxu0 0.0
          %439 = vmatpush1.msra.mxu0 0.0
          %440 = vmatprep.subr.mxu0 0.0
          %441 = vmatpush1.msra.mxu0 0.0
          %442 = vmatprep.subr.mxu0 0.0
          %443 = vmatpush1.msra.mxu0 0.0
          %444 = vmatprep.subr.mxu0 0.0
          %445 = vmatpush1.msra.mxu0 0.0
          %446 = vmatprep.subr.mxu0 0.0
          %447 = vmatpush1.msra.mxu0 0.0
          %448 = vmatprep.subr.mxu0 0.0
          %449 = vmatpush1.msra.mxu0 0.0
          %450 = vmatprep.subr.mxu0 0.0
          %451 = vmatpush1.msra.mxu0 0.0
          %452 = vmatprep.subr.mxu0 0.0
          %453 = vmatpush1.msra.mxu0 0.0
          %454 = vmatprep.subr.mxu0 0.0
          %455 = vmatpush1.msra.mxu0 0.0
          %456 = vmatprep.subr.mxu0 0.0
          %457 = vmatpush1.msra.mxu0 0.0
          %458 = vmatprep.subr.mxu0 0.0
          %459 = vmatpush1.msra.mxu0 0.0
          %460 = vmatprep.subr.mxu0 0.0
          %461 = vmatpush1.msra.mxu0 0.0
          %462 = vmatprep.subr.mxu0 0.0
          %463 = vmatpush1.msra.mxu0 0.0
          %464 = vmatprep.subr.mxu0 0.0
          %465 = vmatpush1.msra.mxu0 0.0
          %466 = vmatprep.subr.mxu0 0.0
          %467 = vmatpush1.msra.mxu0 0.0
          %468 = vmatprep.subr.mxu0 0.0
          %469 = vmatpush1.msra.mxu0 0.0
          %470 = vmatprep.subr.mxu0 0.0
          %471 = vmatpush1.msra.mxu0 0.0
          %472 = vmatprep.subr.mxu0 0.0
          %473 = vmatpush1.msra.mxu0 0.0
          %474 = vmatprep.subr.mxu0 0.0
          %475 = vmatpush1.msra.mxu0 0.0
          %476 = vmatprep.subr.mxu0 0.0
          %477 = vmatpush1.msra.mxu0 0.0
          %478 = vmatprep.subr.mxu0 0.0
          %479 = vmatpush1.msra.mxu0 0.0
          %480 = vmatprep.mubr.f32.mxu0 0.0
          %481 = vmatmul.mubr.f32.gmra.mrb[0].mxu0 %v410
          %v482 = vpop.f32.mrb[0].mxu0
          %v483 = vadd.f32 0.0, %v482
          %v484 = vpop.f32.mrb[0].mxu0
          %485 = vdwg.mxu0
          %v487 = vrot.slane %v406, 4
          %vm489 = vcmask 1043456
          %v490 = vsel %vm489, %v483, %v487
          %v491 = vpack.c.bf16 %v490, %v490
          %vm492 = vcmask 125952
          %vm493 = vsmask.f32 3328
          %vm494 = vmand %vm492, %vm493
          %v495 = vld [vmem:[#allocation2] sm:$0xf]
          %v496 = vsel %vm494, %v491, %v495
          %497 = vst [vmem:[#allocation2] sm:$0xf] %v496
          %v498 = vld [vmem:[#allocation12 + $0x8] sm:$0xf]
          %v500 = vsel %vm408, %v498, 0
          %502 = vmatprep.subr.mxu0 0.0
          %503 = vmatpush1.msra.mxu0 %v404
          %504 = vmatprep.subr.mxu0 0.0
          %505 = vmatpush1.msra.mxu0 %v414
          %506 = vmatprep.subr.mxu0 0.0
          %507 = vmatpush1.msra.mxu0 0.0
          %508 = vmatprep.subr.mxu0 0.0
          %509 = vmatpush1.msra.mxu0 0.0
          %510 = vmatprep.subr.mxu0 0.0
          %511 = vmatpush1.msra.mxu0 0.0
          %512 = vmatprep.subr.mxu0 0.0
          %513 = vmatpush1.msra.mxu0 0.0
          %514 = vmatprep.subr.mxu0 0.0
          %515 = vmatpush1.msra.mxu0 0.0
          %516 = vmatprep.subr.mxu0 0.0
          %517 = vmatpush1.msra.mxu0 0.0
          %518 = vmatprep.subr.mxu0 0.0
          %519 = vmatpush1.msra.mxu0 0.0
          %520 = vmatprep.subr.mxu0 0.0
          %521 = vmatpush1.msra.mxu0 0.0
          %522 = vmatprep.subr.mxu0 0.0
          %523 = vmatpush1.msra.mxu0 0.0
          %524 = vmatprep.subr.mxu0 0.0
          %525 = vmatpush1.msra.mxu0 0.0
          %526 = vmatprep.subr.mxu0 0.0
          %527 = vmatpush1.msra.mxu0 0.0
          %528 = vmatprep.subr.mxu0 0.0
          %529 = vmatpush1.msra.mxu0 0.0
          %530 = vmatprep.subr.mxu0 0.0
          %531 = vmatpush1.msra.mxu0 0.0
          %532 = vmatprep.subr.mxu0 0.0
          %533 = vmatpush1.msra.mxu0 0.0
          %534 = vmatprep.subr.mxu0 0.0
          %535 = vmatpush1.msra.mxu0 0.0
          %536 = vmatprep.subr.mxu0 0.0
          %537 = vmatpush1.msra.mxu0 0.0
          %538 = vmatprep.subr.mxu0 0.0
          %539 = vmatpush1.msra.mxu0 0.0
          %540 = vmatprep.subr.mxu0 0.0
          %541 = vmatpush1.msra.mxu0 0.0
          %542 = vmatprep.subr.mxu0 0.0
          %543 = vmatpush1.msra.mxu0 0.0
          %544 = vmatprep.subr.mxu0 0.0
          %545 = vmatpush1.msra.mxu0 0.0
          %546 = vmatprep.subr.mxu0 0.0
          %547 = vmatpush1.msra.mxu0 0.0
          %548 = vmatprep.subr.mxu0 0.0
          %549 = vmatpush1.msra.mxu0 0.0
          %550 = vmatprep.subr.mxu0 0.0
          %551 = vmatpush1.msra.mxu0 0.0
          %552 = vmatprep.subr.mxu0 0.0
          %553 = vmatpush1.msra.mxu0 0.0
          %554 = vmatprep.subr.mxu0 0.0
          %555 = vmatpush1.msra.mxu0 0.0
          %556 = vmatprep.subr.mxu0 0.0
          %557 = vmatpush1.msra.mxu0 0.0
          %558 = vmatprep.subr.mxu0 0.0
          %559 = vmatpush1.msra.mxu0 0.0
          %560 = vmatprep.subr.mxu0 0.0
          %561 = vmatpush1.msra.mxu0 0.0
          %562 = vmatprep.subr.mxu0 0.0
          %563 = vmatpush1.msra.mxu0 0.0
          %564 = vmatprep.subr.mxu0 0.0
          %565 = vmatpush1.msra.mxu0 0.0
          %566 = vmatprep.mubr.f32.mxu0 0.0
          %567 = vmatmul.mubr.f32.gmra.mrb[0].mxu0 %v500
          %v568 = vpop.f32.mrb[0].mxu0
          %v569 = vadd.f32 0.0, %v568
          %v570 = vpop.f32.mrb[0].mxu0
          %571 = vdwg.mxu0
          %v572 = vsel %vm489, %v569, %v487
          %v573 = vpack.c.bf16 %v572, %v572
          %v574 = vld [vmem:[#allocation3] sm:$0xf]
          %v575 = vsel %vm494, %v573, %v574
          %576 = vst [vmem:[#allocation3] sm:$0xf] %v575
          %vm577 = vcmask 56320
          %578 = vst.msk [vmem:[%s394] sm:$0xff] %vm577, 0.0
          %579 = vst.msk [vmem:[%s394 + $0x8] sm:$0xff] %vm577, 0.0
        $region64: #{tpu_custom_call.1} parent=39 // pred_fallthru
          _
        %v580 = vlaneseq
        %v581 = vshrl.u32 %v580, 7
        %v582 = vadd.s32 %v581, 8
        %v583 = vld [vmem:[%s328] sm:$0x1]
        %v584 = vlaneseq
        %v585 = vshrl.u32 %v584, 7
        %v586 = vsub.s32 0, %v585
        %v587 = vrot.slane %v583, %v586
        %vm588 = vcmp.eq.s32.totalorder %v587, %v581
        %vm589 = vcmp.eq.s32.totalorder %v587, %v582
        %v590 = vsel %vm588, 1, 0
        %v591 = vsel %vm589, 1, 0
        %v592 = vcvt.s32.f32 %v590
        %v593 = vcvt.s32.f32 %v591
        %v594 = vpack.c.bf16 %v593, %v592
        %v595 = vld [vmem:[%s336] sm:$0x1]
        %v596 = vlaneseq
        %v597 = vshrl.u32 %v596, 7
        %v598 = vsub.s32 0, %v597
        %v599 = vrot.slane %v595, %v598
        %vm600 = vcmp.eq.s32.totalorder %v599, %v581
        %vm601 = vcmp.eq.s32.totalorder %v599, %v582
        %v602 = vsel %vm600, 1, 0
        %v603 = vsel %vm601, 1, 0
        %v604 = vcvt.s32.f32 %v602
        %v605 = vcvt.s32.f32 %v603
        %v606 = vpack.c.bf16 %v605, %v604
        %v607 = vld [vmem:[#allocation2] sm:$0xf]
        %vm608 = vcmask 130048
        %v610 = vsel %vm608, %v607, 0
        %612 = vmatprep.subr.bf16.mxu0 0
        %613 = vmatpush1.bf16.msra.mxu0 %v594
        %614 = vmatprep.subr.bf16.mxu0 0
        %615 = vmatpush1.bf16.msra.mxu0 0
        %616 = vmatprep.subr.bf16.mxu0 0
        %617 = vmatpush1.bf16.msra.mxu0 0
        %618 = vmatprep.subr.bf16.mxu0 0
        %619 = vmatpush1.bf16.msra.mxu0 0
        %620 = vmatprep.subr.bf16.mxu0 0
        %621 = vmatpush1.bf16.msra.mxu0 0
        %622 = vmatprep.subr.bf16.mxu0 0
        %623 = vmatpush1.bf16.msra.mxu0 0
        %624 = vmatprep.subr.bf16.mxu0 0
        %625 = vmatpush1.bf16.msra.mxu0 0
        %626 = vmatprep.subr.bf16.mxu0 0
        %627 = vmatpush1.bf16.msra.mxu0 0
        %628 = vmatprep.subr.bf16.mxu0 0
        %629 = vmatpush1.bf16.msra.mxu0 0
        %630 = vmatprep.subr.bf16.mxu0 0
        %631 = vmatpush1.bf16.msra.mxu0 0
        %632 = vmatprep.subr.bf16.mxu0 0
        %633 = vmatpush1.bf16.msra.mxu0 0
        %634 = vmatprep.subr.bf16.mxu0 0
        %635 = vmatpush1.bf16.msra.mxu0 0
        %636 = vmatprep.subr.bf16.mxu0 0
        %637 = vmatpush1.bf16.msra.mxu0 0
        %638 = vmatprep.subr.bf16.mxu0 0
        %639 = vmatpush1.bf16.msra.mxu0 0
        %640 = vmatprep.subr.bf16.mxu0 0
        %641 = vmatpush1.bf16.msra.mxu0 0
        %642 = vmatprep.subr.bf16.mxu0 0
        %643 = vmatpush1.bf16.msra.mxu0 0
        %644 = vmatprep.mubr.bf16.mxu0 0
        %645 = vmatmul.mubr.bf16.gmra.mrb[0].mxu0 %v610
        %v646 = vpop.f32.mrb[0].mxu0
        %v647 = vadd.f32 0.0, %v646
        %v648 = vpop.f32.mrb[0].mxu0
        %v649 = vpop.f32.mrb[0].mxu0
        %v650 = vpop.f32.mrb[0].mxu0
        %651 = vdwg.mxu0
        %v652 = vld [vmem:[#allocation3] sm:$0xf]
        %v654 = vsel %vm608, %v652, 0
        %656 = vmatprep.subr.bf16.mxu0 0
        %657 = vmatpush1.bf16.msra.mxu0 %v606
        %658 = vmatprep.subr.bf16.mxu0 0
        %659 = vmatpush1.bf16.msra.mxu0 0
        %660 = vmatprep.subr.bf16.mxu0 0
        %661 = vmatpush1.bf16.msra.mxu0 0
        %662 = vmatprep.subr.bf16.mxu0 0
        %663 = vmatpush1.bf16.msra.mxu0 0
        %664 = vmatprep.subr.bf16.mxu0 0
        %665 = vmatpush1.bf16.msra.mxu0 0
        %666 = vmatprep.subr.bf16.mxu0 0
        %667 = vmatpush1.bf16.msra.mxu0 0
        %668 = vmatprep.subr.bf16.mxu0 0
        %669 = vmatpush1.bf16.msra.mxu0 0
        %670 = vmatprep.subr.bf16.mxu0 0
        %671 = vmatpush1.bf16.msra.mxu0 0
        %672 = vmatprep.subr.bf16.mxu0 0
        %673 = vmatpush1.bf16.msra.mxu0 0
        %674 = vmatprep.subr.bf16.mxu0 0
        %675 = vmatpush1.bf16.msra.mxu0 0
        %676 = vmatprep.subr.bf16.mxu0 0
        %677 = vmatpush1.bf16.msra.mxu0 0
        %678 = vmatprep.subr.bf16.mxu0 0
        %679 = vmatpush1.bf16.msra.mxu0 0
        %680 = vmatprep.subr.bf16.mxu0 0
        %681 = vmatpush1.bf16.msra.mxu0 0
        %682 = vmatprep.subr.bf16.mxu0 0
        %683 = vmatpush1.bf16.msra.mxu0 0
        %684 = vmatprep.subr.bf16.mxu0 0
        %685 = vmatpush1.bf16.msra.mxu0 0
        %686 = vmatprep.subr.bf16.mxu0 0
        %687 = vmatpush1.bf16.msra.mxu0 0
        %688 = vmatprep.mubr.bf16.mxu0 0
        %689 = vmatmul.mubr.bf16.gmra.mrb[0].mxu0 %v654
        %v690 = vpop.f32.mrb[0].mxu0
        %v691 = vadd.f32 0.0, %v690
        %v692 = vpop.f32.mrb[0].mxu0
        %v693 = vpop.f32.mrb[0].mxu0
        %v694 = vpop.f32.mrb[0].mxu0
        %695 = vdwg.mxu0
        %v696 = vsub.f32 %v647, %v691
        %v697 = vmul.f32 %v696, %v696
        %v699 = vrot.slane %v697, 4
        %vm701 = vcmask 1042432
        %v702 = vsel %vm701, %v699, 0.0
        %v703 = vrot.slane %v702, 4
        %v704 = vadd.f32 %v702, %v703
        %v705 = vrot.slane %v704, 2
        %v706 = vadd.f32 %v704, %v705
        %v707 = vrot.slane %v706, 1
        %v708 = vadd.f32 %v706, %v707
        %v709 = vrsqrt.pop %v708
        %v710 = vmul.f32 %v708, %v709
        %vm711 = vcmp.eq.f32.partialorder %v708, inf
        %v712 = vsel %vm711, %v708, %v710
        %vm713 = vcmp.eq.f32.partialorder %v708, 0.0
        %v714 = vand.u32 %v708, 2147483648
        %v715 = vsel %vm713, %v714, %v712
        %v716 = vadd.f32 %v715, 1.0
        %v717 = vrcp.pop %v716
        %v718 = vmul.f32 %v696, %v717
        %v719 = vadd.f32 %v647, %v691
        %v720 = vld [vmem:[#allocation12 + $0x10] sm:$0xf]
        %v721 = vld [vmem:[%s345] sm:$0xf]
        %vm722 = vcmask 31744
        %v724 = vsel %vm722, %v720, 0
        %vm726 = vcmask 1043456
        %v728 = vsel %vm726, %v721, 0
        %730 = vmatprep.subr.mxu0 0.0
        %731 = vmatpush1.msra.mxu0 %v728
        %732 = vmatprep.subr.mxu0 0.0
        %733 = vmatpush1.msra.mxu0 0.0
        %734 = vmatprep.subr.mxu0 0.0
        %735 = vmatpush1.msra.mxu0 0.0
        %736 = vmatprep.subr.mxu0 0.0
        %737 = vmatpush1.msra.mxu0 0.0
        %738 = vmatprep.subr.mxu0 0.0
        %739 = vmatpush1.msra.mxu0 0.0
        %740 = vmatprep.subr.mxu0 0.0
        %741 = vmatpush1.msra.mxu0 0.0
        %742 = vmatprep.subr.mxu0 0.0
        %743 = vmatpush1.msra.mxu0 0.0
        %744 = vmatprep.subr.mxu0 0.0
        %745 = vmatpush1.msra.mxu0 0.0
        %746 = vmatprep.subr.mxu0 0.0
        %747 = vmatpush1.msra.mxu0 0.0
        %748 = vmatprep.subr.mxu0 0.0
        %749 = vmatpush1.msra.mxu0 0.0
        %750 = vmatprep.subr.mxu0 0.0
        %751 = vmatpush1.msra.mxu0 0.0
        %752 = vmatprep.subr.mxu0 0.0
        %753 = vmatpush1.msra.mxu0 0.0
        %754 = vmatprep.subr.mxu0 0.0
        %755 = vmatpush1.msra.mxu0 0.0
        %756 = vmatprep.subr.mxu0 0.0
        %757 = vmatpush1.msra.mxu0 0.0
        %758 = vmatprep.subr.mxu0 0.0
        %759 = vmatpush1.msra.mxu0 0.0
        %760 = vmatprep.subr.mxu0 0.0
        %761 = vmatpush1.msra.mxu0 0.0
        %762 = vmatprep.subr.mxu0 0.0
        %763 = vmatpush1.msra.mxu0 0.0
        %764 = vmatprep.subr.mxu0 0.0
        %765 = vmatpush1.msra.mxu0 0.0
        %766 = vmatprep.subr.mxu0 0.0
        %767 = vmatpush1.msra.mxu0 0.0
        %768 = vmatprep.subr.mxu0 0.0
        %769 = vmatpush1.msra.mxu0 0.0
        %770 = vmatprep.subr.mxu0 0.0
        %771 = vmatpush1.msra.mxu0 0.0
        %772 = vmatprep.subr.mxu0 0.0
        %773 = vmatpush1.msra.mxu0 0.0
        %774 = vmatprep.subr.mxu0 0.0
        %775 = vmatpush1.msra.mxu0 0.0
        %776 = vmatprep.subr.mxu0 0.0
        %777 = vmatpush1.msra.mxu0 0.0
        %778 = vmatprep.subr.mxu0 0.0
        %779 = vmatpush1.msra.mxu0 0.0
        %780 = vmatprep.subr.mxu0 0.0
        %781 = vmatpush1.msra.mxu0 0.0
        %782 = vmatprep.subr.mxu0 0.0
        %783 = vmatpush1.msra.mxu0 0.0
        %784 = vmatprep.subr.mxu0 0.0
        %785 = vmatpush1.msra.mxu0 0.0
        %786 = vmatprep.subr.mxu0 0.0
        %787 = vmatpush1.msra.mxu0 0.0
        %788 = vmatprep.subr.mxu0 0.0
        %789 = vmatpush1.msra.mxu0 0.0
        %790 = vmatprep.subr.mxu0 0.0
        %791 = vmatpush1.msra.mxu0 0.0
        %792 = vmatprep.subr.mxu0 0.0
        %793 = vmatpush1.msra.mxu0 0.0
        %794 = vmatprep.mubr.f32.mxu0 0.0
        %795 = vmatmul.mubr.f32.gmra.mrb[0].mxu0 %v724
        %v796 = vpop.f32.mrb[0].mxu0
        %v797 = vadd.f32 0.0, %v796
        %v798 = vpop.f32.mrb[0].mxu0
        %799 = vdwg.mxu0
        %v800 = vadd.f32 %v719, %v797
        %v801 = vld [vmem:[#allocation12 + $0x18] sm:$0xf]
        %803 = vset.pattern.permute.xlu0 0
        %804 = vperm.xlu0 %803, %v801
        %v805 = vpop.permute.xlu0 %804
        %v807 = vmul.f32 %v805, %v708
        %v808 = vadd.f32 %v800, %v807
        %v809 = vld [vmem:[#allocation12 + $0x20] sm:$0xf]
        %811 = vset.pattern.permute.xlu0 0
        %812 = vperm.xlu0 %811, %v809
        %v813 = vpop.permute.xlu0 %812
        %v815 = vadd.f32 %v808, %v813
        %v816 = vmax.f32 %v815, 0.0
        %v817 = vld [vmem:[#allocation12 + $0x28] sm:$0xf]
        %v818 = vld [vmem:[#allocation12 + $0x30] sm:$0xf]
        %820 = vset.pattern.permute.xlu0 0
        %821 = vperm.xlu0 %820, %v818
        %v822 = vpop.permute.xlu0 %821
        %v825 = vsel %vm722, %v817, 0
        %v828 = vsel %vm726, %v816, 0
        %830 = vmatprep.subr.mxu0 0.0
        %831 = vmatpush1.msra.mxu0 %v828
        %832 = vmatprep.subr.mxu0 0.0
        %833 = vmatpush1.msra.mxu0 0.0
        %834 = vmatprep.subr.mxu0 0.0
        %835 = vmatpush1.msra.mxu0 0.0
        %836 = vmatprep.subr.mxu0 0.0
        %837 = vmatpush1.msra.mxu0 0.0
        %838 = vmatprep.subr.mxu0 0.0
        %839 = vmatpush1.msra.mxu0 0.0
        %840 = vmatprep.subr.mxu0 0.0
        %841 = vmatpush1.msra.mxu0 0.0
        %842 = vmatprep.subr.mxu0 0.0
        %843 = vmatpush1.msra.mxu0 0.0
        %844 = vmatprep.subr.mxu0 0.0
        %845 = vmatpush1.msra.mxu0 0.0
        %846 = vmatprep.subr.mxu0 0.0
        %847 = vmatpush1.msra.mxu0 0.0
        %848 = vmatprep.subr.mxu0 0.0
        %849 = vmatpush1.msra.mxu0 0.0
        %850 = vmatprep.subr.mxu0 0.0
        %851 = vmatpush1.msra.mxu0 0.0
        %852 = vmatprep.subr.mxu0 0.0
        %853 = vmatpush1.msra.mxu0 0.0
        %854 = vmatprep.subr.mxu0 0.0
        %855 = vmatpush1.msra.mxu0 0.0
        %856 = vmatprep.subr.mxu0 0.0
        %857 = vmatpush1.msra.mxu0 0.0
        %858 = vmatprep.subr.mxu0 0.0
        %859 = vmatpush1.msra.mxu0 0.0
        %860 = vmatprep.subr.mxu0 0.0
        %861 = vmatpush1.msra.mxu0 0.0
        %862 = vmatprep.subr.mxu0 0.0
        %863 = vmatpush1.msra.mxu0 0.0
        %864 = vmatprep.subr.mxu0 0.0
        %865 = vmatpush1.msra.mxu0 0.0
        %866 = vmatprep.subr.mxu0 0.0
        %867 = vmatpush1.msra.mxu0 0.0
        %868 = vmatprep.subr.mxu0 0.0
        %869 = vmatpush1.msra.mxu0 0.0
        %870 = vmatprep.subr.mxu0 0.0
        %871 = vmatpush1.msra.mxu0 0.0
        %872 = vmatprep.subr.mxu0 0.0
        %873 = vmatpush1.msra.mxu0 0.0
        %874 = vmatprep.subr.mxu0 0.0
        %875 = vmatpush1.msra.mxu0 0.0
        %876 = vmatprep.subr.mxu0 0.0
        %877 = vmatpush1.msra.mxu0 0.0
        %878 = vmatprep.subr.mxu0 0.0
        %879 = vmatpush1.msra.mxu0 0.0
        %880 = vmatprep.subr.mxu0 0.0
        %881 = vmatpush1.msra.mxu0 0.0
        %882 = vmatprep.subr.mxu0 0.0
        %883 = vmatpush1.msra.mxu0 0.0
        %884 = vmatprep.subr.mxu0 0.0
        %885 = vmatpush1.msra.mxu0 0.0
        %886 = vmatprep.subr.mxu0 0.0
        %887 = vmatpush1.msra.mxu0 0.0
        %888 = vmatprep.subr.mxu0 0.0
        %889 = vmatpush1.msra.mxu0 0.0
        %890 = vmatprep.subr.mxu0 0.0
        %891 = vmatpush1.msra.mxu0 0.0
        %892 = vmatprep.subr.mxu0 0.0
        %893 = vmatpush1.msra.mxu0 0.0
        %894 = vmatprep.mubr.f32.mxu0 0.0
        %895 = vmatmul.mubr.f32.gmra.mrb[0].mxu0 %v825
        %v896 = vpop.f32.mrb[0].mxu0
        %v897 = vadd.f32 %v822, %v896
        %v898 = vpop.f32.mrb[0].mxu0
        %899 = vdwg.mxu0
        %v900 = vld [vmem:[#allocation12 + $0x38] sm:$0x3]
        %v901 = vld [vmem:[#allocation12 + $0x40] sm:$0x3]
        %903 = vset.pattern.permute.xlu0 0
        %904 = vperm.xlu0 %903, %v901
        %v905 = vpop.permute.xlu0 %904
        %v908 = vsel %vm722, %v900, 0
        %v911 = vsel %vm726, %v897, 0
        %913 = vmatprep.subr.mxu0 0.0
        %914 = vmatpush1.msra.mxu0 %v911
        %915 = vmatprep.subr.mxu0 0.0
        %916 = vmatpush1.msra.mxu0 0.0
        %917 = vmatprep.subr.mxu0 0.0
        %918 = vmatpush1.msra.mxu0 0.0
        %919 = vmatprep.subr.mxu0 0.0
        %920 = vmatpush1.msra.mxu0 0.0
        %921 = vmatprep.subr.mxu0 0.0
        %922 = vmatpush1.msra.mxu0 0.0
        %923 = vmatprep.subr.mxu0 0.0
        %924 = vmatpush1.msra.mxu0 0.0
        %925 = vmatprep.subr.mxu0 0.0
        %926 = vmatpush1.msra.mxu0 0.0
        %927 = vmatprep.subr.mxu0 0.0
        %928 = vmatpush1.msra.mxu0 0.0
        %929 = vmatprep.subr.mxu0 0.0
        %930 = vmatpush1.msra.mxu0 0.0
        %931 = vmatprep.subr.mxu0 0.0
        %932 = vmatpush1.msra.mxu0 0.0
        %933 = vmatprep.subr.mxu0 0.0
        %934 = vmatpush1.msra.mxu0 0.0
        %935 = vmatprep.subr.mxu0 0.0
        %936 = vmatpush1.msra.mxu0 0.0
        %937 = vmatprep.subr.mxu0 0.0
        %938 = vmatpush1.msra.mxu0 0.0
        %939 = vmatprep.subr.mxu0 0.0
        %940 = vmatpush1.msra.mxu0 0.0
        %941 = vmatprep.subr.mxu0 0.0
        %942 = vmatpush1.msra.mxu0 0.0
        %943 = vmatprep.subr.mxu0 0.0
        %944 = vmatpush1.msra.mxu0 0.0
        %945 = vmatprep.subr.mxu0 0.0
        %946 = vmatpush1.msra.mxu0 0.0
        %947 = vmatprep.subr.mxu0 0.0
        %948 = vmatpush1.msra.mxu0 0.0
        %949 = vmatprep.subr.mxu0 0.0
        %950 = vmatpush1.msra.mxu0 0.0
        %951 = vmatprep.subr.mxu0 0.0
        %952 = vmatpush1.msra.mxu0 0.0
        %953 = vmatprep.subr.mxu0 0.0
        %954 = vmatpush1.msra.mxu0 0.0
        %955 = vmatprep.subr.mxu0 0.0
        %956 = vmatpush1.msra.mxu0 0.0
        %957 = vmatprep.subr.mxu0 0.0
        %958 = vmatpush1.msra.mxu0 0.0
        %959 = vmatprep.subr.mxu0 0.0
        %960 = vmatpush1.msra.mxu0 0.0
        %961 = vmatprep.subr.mxu0 0.0
        %962 = vmatpush1.msra.mxu0 0.0
        %963 = vmatprep.subr.mxu0 0.0
        %964 = vmatpush1.msra.mxu0 0.0
        %965 = vmatprep.subr.mxu0 0.0
        %966 = vmatpush1.msra.mxu0 0.0
        %967 = vmatprep.subr.mxu0 0.0
        %968 = vmatpush1.msra.mxu0 0.0
        %969 = vmatprep.subr.mxu0 0.0
        %970 = vmatpush1.msra.mxu0 0.0
        %971 = vmatprep.subr.mxu0 0.0
        %972 = vmatpush1.msra.mxu0 0.0
        %973 = vmatprep.subr.mxu0 0.0
        %974 = vmatpush1.msra.mxu0 0.0
        %975 = vmatprep.subr.mxu0 0.0
        %976 = vmatpush1.msra.mxu0 0.0
        %977 = vmatprep.mubr.f32.mxu0 0.0
        %978 = vmatmul.mubr.f32.gmra.mrb[0].mxu0 %v908
        %v979 = vpop.f32.mrb[0].mxu0
        %v980 = vadd.f32 %v905, %v979
        %v981 = vpop.f32.mrb[0].mxu0
        %982 = vdwg.mxu0
        %v983 = vmax.f32 %v980, 0.0
        %v984 = vld [vmem:[#allocation12 + $0x48] sm:$0x3]
        %986 = vset.pattern.permute.xlu0 0
        %987 = vperm.xlu0 %986, %v984
        %v988 = vpop.permute.xlu0 %987
        %v990 = vmul.f32 %v983, %v988
        %vm991 = vcmask 1041408
        %v992 = vsel %vm991, %v990, 0.0
        %v993 = vrot.slane %v992, 4
        %v994 = vadd.f32 %v992, %v993
        %v995 = vrot.slane %v994, 2
        %v996 = vadd.f32 %v994, %v995
        %v997 = vrot.slane %v996, 1
        %v998 = vadd.f32 %v996, %v997
        %v999 = vmul.f32 %v718, %v998
        %v1001 = vrot.slane %v999, 4
        %v1003 = vrot.slane %v897, 5
        %v1005 = vsel %vm701, %v1001, %v1003
        %v1006 = vpack.c.bf16 %v1005, %v1005
        %v1007 = vld [vmem:[%s394] sm:$0xff]
        %v1008 = vld [vmem:[%s394 + $0x8] sm:$0xff]
        %1009 = vmatprep.subr.bf16.mxu0 0
        %1010 = vmatpush1.bf16.xpose.msra.mxu0 %v1006
        %1011 = vmatprep.subr.bf16.mxu0 0
        %1012 = vmatpush1.bf16.xpose.msra.mxu0 0
        %1013 = vmatprep.subr.bf16.mxu0 0
        %1014 = vmatpush1.bf16.xpose.msra.mxu0 0
        %1015 = vmatprep.subr.bf16.mxu0 0
        %1016 = vmatpush1.bf16.xpose.msra.mxu0 0
        %1017 = vmatprep.subr.bf16.mxu0 0
        %1018 = vmatpush1.bf16.xpose.msra.mxu0 0
        %1019 = vmatprep.subr.bf16.mxu0 0
        %1020 = vmatpush1.bf16.xpose.msra.mxu0 0
        %1021 = vmatprep.subr.bf16.mxu0 0
        %1022 = vmatpush1.bf16.xpose.msra.mxu0 0
        %1023 = vmatprep.subr.bf16.mxu0 0
        %1024 = vmatpush1.bf16.xpose.msra.mxu0 0
        %1025 = vmatprep.subr.bf16.mxu0 0
        %1026 = vmatpush1.bf16.xpose.msra.mxu0 0
        %1027 = vmatprep.subr.bf16.mxu0 0
        %1028 = vmatpush1.bf16.xpose.msra.mxu0 0
        %1029 = vmatprep.subr.bf16.mxu0 0
        %1030 = vmatpush1.bf16.xpose.msra.mxu0 0
        %1031 = vmatprep.subr.bf16.mxu0 0
        %1032 = vmatpush1.bf16.xpose.msra.mxu0 0
        %1033 = vmatprep.subr.bf16.mxu0 0
        %1034 = vmatpush1.bf16.xpose.msra.mxu0 0
        %1035 = vmatprep.subr.bf16.mxu0 0
        %1036 = vmatpush1.bf16.xpose.msra.mxu0 0
        %1037 = vmatprep.subr.bf16.mxu0 0
        %1038 = vmatpush1.bf16.xpose.msra.mxu0 0
        %1039 = vmatprep.subr.bf16.mxu0 0
        %1040 = vmatpush1.bf16.xpose.msra.mxu0 0
        %1041 = vmatprep.mubr.bf16.mxu0 0
        %1042 = vmatmul.mubr.bf16.gmra.mrb[0].mxu0 %v594
        %v1043 = vpop.f32.mrb[0].mxu0
        %v1044 = vadd.f32 0.0, %v1043
        %v1045 = vpop.f32.mrb[0].mxu0
        %v1046 = vpop.f32.mrb[0].mxu0
        %v1047 = vadd.f32 0.0, %v1046
        %v1048 = vpop.f32.mrb[0].mxu0
        %1049 = vdwg.mxu0
        %v1050 = vadd.f32 %v1007, %v1044
        %v1051 = vadd.f32 %v1008, %v1047
        %vm1052 = vcmask 56320
        %1053 = vst.msk [vmem:[%s394] sm:$0xff] %vm1052, %v1050
        %1054 = vst.msk [vmem:[%s394 + $0x8] sm:$0xff] %vm1052, %v1051
        %v1055 = vld [vmem:[#allocation12 + $0x50] sm:$0x3]
        %v1056 = vld [vmem:[#allocation12 + $0x58] sm:$0x3]
        %1058 = vset.pattern.permute.xlu0 0
        %1059 = vperm.xlu0 %1058, %v1056
        %v1060 = vpop.permute.xlu0 %1059
        %v1063 = vsel %vm722, %v1055, 0
        %1065 = vmatprep.subr.mxu0 0.0
        %1066 = vmatpush1.msra.mxu0 %v911
        %1067 = vmatprep.subr.mxu0 0.0
        %1068 = vmatpush1.msra.mxu0 0.0
        %1069 = vmatprep.subr.mxu0 0.0
        %1070 = vmatpush1.msra.mxu0 0.0
        %1071 = vmatprep.subr.mxu0 0.0
        %1072 = vmatpush1.msra.mxu0 0.0
        %1073 = vmatprep.subr.mxu0 0.0
        %1074 = vmatpush1.msra.mxu0 0.0
        %1075 = vmatprep.subr.mxu0 0.0
        %1076 = vmatpush1.msra.mxu0 0.0
        %1077 = vmatprep.subr.mxu0 0.0
        %1078 = vmatpush1.msra.mxu0 0.0
        %1079 = vmatprep.subr.mxu0 0.0
        %1080 = vmatpush1.msra.mxu0 0.0
        %1081 = vmatprep.subr.mxu0 0.0
        %1082 = vmatpush1.msra.mxu0 0.0
        %1083 = vmatprep.subr.mxu0 0.0
        %1084 = vmatpush1.msra.mxu0 0.0
        %1085 = vmatprep.subr.mxu0 0.0
        %1086 = vmatpush1.msra.mxu0 0.0
        %1087 = vmatprep.subr.mxu0 0.0
        %1088 = vmatpush1.msra.mxu0 0.0
        %1089 = vmatprep.subr.mxu0 0.0
        %1090 = vmatpush1.msra.mxu0 0.0
        %1091 = vmatprep.subr.mxu0 0.0
        %1092 = vmatpush1.msra.mxu0 0.0
        %1093 = vmatprep.subr.mxu0 0.0
        %1094 = vmatpush1.msra.mxu0 0.0
        %1095 = vmatprep.subr.mxu0 0.0
        %1096 = vmatpush1.msra.mxu0 0.0
        %1097 = vmatprep.subr.mxu0 0.0
        %1098 = vmatpush1.msra.mxu0 0.0
        %1099 = vmatprep.subr.mxu0 0.0
        %1100 = vmatpush1.msra.mxu0 0.0
        %1101 = vmatprep.subr.mxu0 0.0
        %1102 = vmatpush1.msra.mxu0 0.0
        %1103 = vmatprep.subr.mxu0 0.0
        %1104 = vmatpush1.msra.mxu0 0.0
        %1105 = vmatprep.subr.mxu0 0.0
        %1106 = vmatpush1.msra.mxu0 0.0
        %1107 = vmatprep.subr.mxu0 0.0
        %1108 = vmatpush1.msra.mxu0 0.0
        %1109 = vmatprep.subr.mxu0 0.0
        %1110 = vmatpush1.msra.mxu0 0.0
        %1111 = vmatprep.subr.mxu0 0.0
        %1112 = vmatpush1.msra.mxu0 0.0
        %1113 = vmatprep.subr.mxu0 0.0
        %1114 = vmatpush1.msra.mxu0 0.0
        %1115 = vmatprep.subr.mxu0 0.0
        %1116 = vmatpush1.msra.mxu0 0.0
        %1117 = vmatprep.subr.mxu0 0.0
        %1118 = vmatpush1.msra.mxu0 0.0
        %1119 = vmatprep.subr.mxu0 0.0
        %1120 = vmatpush1.msra.mxu0 0.0
        %1121 = vmatprep.subr.mxu0 0.0
        %1122 = vmatpush1.msra.mxu0 0.0
        %1123 = vmatprep.subr.mxu0 0.0
        %1124 = vmatpush1.msra.mxu0 0.0
        %1125 = vmatprep.subr.mxu0 0.0
        %1126 = vmatpush1.msra.mxu0 0.0
        %1127 = vmatprep.subr.mxu0 0.0
        %1128 = vmatpush1.msra.mxu0 0.0
        %1129 = vmatprep.mubr.f32.mxu0 0.0
        %1130 = vmatmul.mubr.f32.gmra.mrb[0].mxu0 %v1063
        %v1131 = vpop.f32.mrb[0].mxu0
        %v1132 = vadd.f32 %v1060, %v1131
        %v1133 = vpop.f32.mrb[0].mxu0
        %1134 = vdwg.mxu0
        %v1135 = vld [vmem:[#allocation12 + $0x60] sm:$0xf]
        %v1136 = vld [vmem:[#allocation12 + $0x68] sm:$0xf]
        %1138 = vset.pattern.permute.xlu0 0
        %1139 = vperm.xlu0 %1138, %v1136
        %v1140 = vpop.permute.xlu0 %1139
        %vm1142 = vcmask 15360
        %v1144 = vsel %vm1142, %v1135, 0
        %v1147 = vsel %vm991, %v1132, 0
        %1149 = vmatprep.subr.mxu0 0.0
        %1150 = vmatpush1.msra.mxu0 %v1147
        %1151 = vmatprep.subr.mxu0 0.0
        %1152 = vmatpush1.msra.mxu0 0.0
        %1153 = vmatprep.subr.mxu0 0.0
        %1154 = vmatpush1.msra.mxu0 0.0
        %1155 = vmatprep.subr.mxu0 0.0
        %1156 = vmatpush1.msra.mxu0 0.0
        %1157 = vmatprep.subr.mxu0 0.0
        %1158 = vmatpush1.msra.mxu0 0.0
        %1159 = vmatprep.subr.mxu0 0.0
        %1160 = vmatpush1.msra.mxu0 0.0
        %1161 = vmatprep.subr.mxu0 0.0
        %1162 = vmatpush1.msra.mxu0 0.0
        %1163 = vmatprep.subr.mxu0 0.0
        %1164 = vmatpush1.msra.mxu0 0.0
        %1165 = vmatprep.subr.mxu0 0.0
        %1166 = vmatpush1.msra.mxu0 0.0
        %1167 = vmatprep.subr.mxu0 0.0
        %1168 = vmatpush1.msra.mxu0 0.0
        %1169 = vmatprep.subr.mxu0 0.0
        %1170 = vmatpush1.msra.mxu0 0.0
        %1171 = vmatprep.subr.mxu0 0.0
        %1172 = vmatpush1.msra.mxu0 0.0
        %1173 = vmatprep.subr.mxu0 0.0
        %1174 = vmatpush1.msra.mxu0 0.0
        %1175 = vmatprep.subr.mxu0 0.0
        %1176 = vmatpush1.msra.mxu0 0.0
        %1177 = vmatprep.subr.mxu0 0.0
        %1178 = vmatpush1.msra.mxu0 0.0
        %1179 = vmatprep.subr.mxu0 0.0
        %1180 = vmatpush1.msra.mxu0 0.0
        %1181 = vmatprep.subr.mxu0 0.0
        %1182 = vmatpush1.msra.mxu0 0.0
        %1183 = vmatprep.subr.mxu0 0.0
        %1184 = vmatpush1.msra.mxu0 0.0
        %1185 = vmatprep.subr.mxu0 0.0
        %1186 = vmatpush1.msra.mxu0 0.0
        %1187 = vmatprep.subr.mxu0 0.0
        %1188 = vmatpush1.msra.mxu0 0.0
        %1189 = vmatprep.subr.mxu0 0.0
        %1190 = vmatpush1.msra.mxu0 0.0
        %1191 = vmatprep.subr.mxu0 0.0
        %1192 = vmatpush1.msra.mxu0 0.0
        %1193 = vmatprep.subr.mxu0 0.0
        %1194 = vmatpush1.msra.mxu0 0.0
        %1195 = vmatprep.subr.mxu0 0.0
        %1196 = vmatpush1.msra.mxu0 0.0
        %1197 = vmatprep.subr.mxu0 0.0
        %1198 = vmatpush1.msra.mxu0 0.0
        %1199 = vmatprep.subr.mxu0 0.0
        %1200 = vmatpush1.msra.mxu0 0.0
        %1201 = vmatprep.subr.mxu0 0.0
        %1202 = vmatpush1.msra.mxu0 0.0
        %1203 = vmatprep.subr.mxu0 0.0
        %1204 = vmatpush1.msra.mxu0 0.0
        %1205 = vmatprep.subr.mxu0 0.0
        %1206 = vmatpush1.msra.mxu0 0.0
        %1207 = vmatprep.subr.mxu0 0.0
        %1208 = vmatpush1.msra.mxu0 0.0
        %1209 = vmatprep.subr.mxu0 0.0
        %1210 = vmatpush1.msra.mxu0 0.0
        %1211 = vmatprep.subr.mxu0 0.0
        %1212 = vmatpush1.msra.mxu0 0.0
        %1213 = vmatprep.mubr.f32.mxu0 0.0
        %1214 = vmatmul.mubr.f32.gmra.mrb[0].mxu0 %v1144
        %v1215 = vpop.f32.mrb[0].mxu0
        %v1216 = vadd.f32 %v1140, %v1215
        %v1217 = vpop.f32.mrb[0].mxu0
        %1218 = vdwg.mxu0
        %v1220 = vrot.slane %v1216, 6
        %v1222 = vsel %vm991, %v1132, %v1220
        %1223 = vst [vmem:[%s387] sm:$0x3f] %v1222
        %s1224 = sand.u32 %s179, 1
        %s1225 = scalar_lea.sflag [#allocation6], %s1224
        %s1226 = sand.u32 %s179, 1
        %s1227 = smul.addr %s1226, 8
        %s1228 = scalar_lea.vmem [#allocation13], %s1227
        %s1229 = sand.u32 %s205, 1
        %s1230 = scalar_lea.sflag [#allocation15], %s1229
        %s1231 = sand.u32 %s205, 1
        %s1232 = smul.addr %s1231, 16
        %s1233 = scalar_lea.vmem [#allocation14], %s1232
        // Predicated region
        $region65: #{tpu_custom_call.1} parent=39 // pred_check
          %p1234 = pneg %p189
        $region66: #{tpu_custom_call.1} parent=39 // pred_check_branch
          %1236 = sbr.rel (%p1234) target = $region68
        $region67: #{tpu_custom_call.1} parent=39 // pred_region
          %s1237 = sadd.s32 %s35, %s36
          %s1239 = ssub.s32 128, 128
          %1240 = vsyncadd %s1225, %s1239
          %s1241 = smul.addr %s1237, 128
          %s1242 = scalar_lea.hbm %s5, %s1241
          %s1244 = sshll.u32 %s1228, 4
          %s1245 = int_to_ptr.vmem [resolvable:$true] %s1244
          %1247 = dma.vmem_to_hbm [thread:$0]  %s1245, 128, %s1242, %s1225
        $region68: #{tpu_custom_call.1} parent=39 // pred_fallthru
          _
        // Predicated region
        $region69: #{tpu_custom_call.1} parent=39 // pred_check
          %p1248 = pneg %p215
        $region70: #{tpu_custom_call.1} parent=39 // pred_check_branch
          %1250 = sbr.rel (%p1248) target = $region72
        $region71: #{tpu_custom_call.1} parent=39 // pred_region
          %s1252 = ssub.s32 256, 256
          %1253 = vsyncadd %s1230, %s1252
          %s1254 = smul.addr %s35, 2
          %s1255 = smul.addr %s1254, 128
          %s1256 = scalar_lea.hbm %s6, %s1255
          %s1257 = sshll.u32 %s1233, 4
          %s1258 = int_to_ptr.vmem [resolvable:$true] %s1257
          %1263 = dma.vmem_to_hbm [thread:$0]  %s1258, 256, %s1256, %s1230, 128, 128, 8
        $region72: #{tpu_custom_call.1} parent=39 // pred_fallthru
          _
      $region40: #{tpu_custom_call.1} parent=5 // pred_fallthru
        _
      %p1264 = scmp.le.s32.totalorder 2, %s26
      // Predicated region
      $region73: #{tpu_custom_call.1} parent=5 // pred_check
        %p1265 = pneg %p1264
      $region74: #{tpu_custom_call.1} parent=5 // pred_check_branch
        %1267 = sbr.rel (%p1265) target = $region76
      $region75: #{tpu_custom_call.1} parent=5 // pred_region
        %s1268 = ssub.s32 %s26, 2
        // Predicated region
        $region77: #{tpu_custom_call.1} parent=75 // pred_check
          %p1269 = pneg %p195
        $region78: #{tpu_custom_call.1} parent=75 // pred_check_branch
          %1271 = sbr.rel (%p1269) target = $region80
        $region79: #{tpu_custom_call.1} parent=75 // pred_region
          %s1272 = sand.u32 %s180, 1
          %s1273 = scalar_lea.sflag [#allocation6], %s1272
          %s1274 = sand.u32 %s180, 1
          %s1275 = smul.addr %s1274, 8
          %s1276 = scalar_lea.vmem [#allocation13], %s1275
          %1277 = dma.done %s1273, 128
        $region80: #{tpu_custom_call.1} parent=75 // pred_fallthru
          _
        // Predicated region
        $region81: #{tpu_custom_call.1} parent=75 // pred_check
          %p1278 = pneg %p221
        $region82: #{tpu_custom_call.1} parent=75 // pred_check_branch
          %1280 = sbr.rel (%p1278) target = $region84
        $region83: #{tpu_custom_call.1} parent=75 // pred_region
          %s1281 = sand.u32 %s206, 1
          %s1282 = scalar_lea.sflag [#allocation15], %s1281
          %s1283 = sand.u32 %s206, 1
          %s1284 = smul.addr %s1283, 16
          %s1285 = scalar_lea.vmem [#allocation14], %s1284
          %1286 = dma.done %s1282, 256
        $region84: #{tpu_custom_call.1} parent=75 // pred_fallthru
          _
      $region76: #{tpu_custom_call.1} parent=5 // pred_fallthru
        _
    $region6: #{tpu_custom_call.1} parent=1 // loop_footer
      %s30 = sadd.s32 1, %s26
    $region7: #{tpu_custom_call.1} parent=1 // loop_footer_branch
      %25 = sbr.rel target = $region3
    $region8: #{tpu_custom_call.1} parent=1 // loop_exit
      _
    %1287 = vsyncpa [#allocation5], 1
    %s1288 = scalar_lea.sflag [#allocation5], 1
    %1289 = vsyncpa %s1288, 1
    %1290 = vsyncpa [#allocation8], 1
    %s1291 = scalar_lea.sflag [#allocation8], 1
    %1292 = vsyncpa %s1291, 1
    %1293 = vsyncpa [#allocation11], 1
    %1294 = vsyncpa [#allocation6], 1
    %s1295 = scalar_lea.sflag [#allocation6], 1
    %1296 = vsyncpa %s1295, 1
    %1297 = vsyncpa [#allocation15], 1
    %s1298 = scalar_lea.sflag [#allocation15], 1
    %1299 = vsyncpa %s1298, 1

</llo_original>
